<compile_context>
chip_gen: v6e
topology: v6e:2x2x1
jax: 0.10.0
libtpu: 0.0.40
codegen_flags: <defaults>
</compile_context>

<pallas_src>
import math

import jax
import jax.numpy as jnp
from jax import lax
from jax.experimental import pallas as pl
from jax.experimental.pallas import tpu as pltpu


def _make_mha_kernel(*, h, approx_reciprocal, return_attn):
    """Build the fused multi-head-attention kernel body."""

    def kernel(q_ref, k_ref, v_ref, w_ref, b_ref, out_ref, *maybe_attn_ref):
        Bt, S, D = q_ref.shape          # batch tile, seq len, d_model
        d_k = D // h
        n_rows = Bt * S

        def t_last2(x):
            # (Bt, A, C) -> (Bt, C, A) using only plain 2-D transposes plus
            # leading-dim reshapes / a leading-dim stack -- the transpose
            # forms Mosaic lowers robustly.  Bt is a small static Python int.
            _, a, c = x.shape
            if Bt == 1:
                return x.reshape(a, c).T.reshape(1, c, a)
            return jnp.stack([x[b].T for b in range(Bt)], axis=0)

        def project_t(x_ref, idx):
            # ONE full-width MXU matmul (n_rows, D) @ (D, D) per projection
            # (weights packed host-side as W.T, 1/sqrt(d_k) already folded
            # into the Q weight/bias), then a cheap XLU relayout to the
            # per-(batch, head) "transposed" layout (Bt*h, d_k, S).
            x = x_ref[...].reshape(n_rows, D)
            y = jnp.dot(x, w_ref[idx], preferred_element_type=jnp.float32)
            y = y + b_ref[idx]                                  # (1, D) bcast
            y_t = t_last2(y.reshape(Bt, S, D))                  # (Bt, D, S)
            return y_t.reshape(Bt, h, d_k, S).reshape(Bt * h, d_k, S)

        q_t = project_t(q_ref, 0)       # (Bt*h, d_k, S), pre-scaled
        k_t = project_t(k_ref, 1)
        v_t = project_t(v_ref, 2)

        # scores[n, q, k] = sum_d q_t[n, d, q] * k_t[n, d, k]
        # (== einsum('ndq,ndk->nqk'); contraction over the second-minor dim of
        # both operands -- same dimension numbers as flash-attention bwd.)
        s = lax.dot_general(q_t, k_t,
                            dimension_numbers=(((1,), (1,)), ((0,), (0,))),
                            preferred_element_type=jnp.float32)  # (Bt*h, S, S)
        # TODO(synk): optional attention mask (mask is None on this qlib
        # forward path) and flash-style KV blocking for very long S.
        m = jnp.max(s, axis=-1, keepdims=True)
        e = jnp.exp(s - m)
        l = jnp.sum(e, axis=-1, keepdims=True)
        p = e * pl.reciprocal(l, approx=approx_reciprocal)       # softmax
        # dropout(p=0) is the identity -> nothing to do.

        if return_attn:
            attn_ref = maybe_attn_ref[0]
            # Single store, already in the (B, h, S, S) PyTorch layout.
            attn_ref[...] = p.reshape(Bt, h, S, S).astype(attn_ref.dtype)

        # ctx_t[n, d, q] = sum_k v_t[n, d, k] * p[n, q, k]
        # (== einsum('ndk,nqk->ndq'); A @ B^T orientation.)
        ctx_t = lax.dot_general(v_t, p,
                                dimension_numbers=(((2,), (2,)), ((0,), (0,))),
                                preferred_element_type=jnp.float32)  # (Bt*h, d_k, S)

        # Fold the head concat back into the lane dim (head-major order, same
        # as PyTorch .transpose(1,2).contiguous().view(nb, -1, h*d_k)), then
        # do the output projection as ONE (n_rows, D) @ (D, D) matmul: the
        # head reduction rides the MXU contraction (K = h*d_k = D).
        ctx_cat = t_last2(ctx_t.reshape(Bt, h, d_k, S).reshape(Bt, D, S))  # (Bt, S, D)
        ctx_cat = ctx_cat.reshape(n_rows, D)
        out = jnp.dot(ctx_cat, w_ref[3], preferred_element_type=jnp.float32)
        out = out + b_ref[3]
        # NOTE: at D < 128 this store uses masked lanes; a lane-dense
        # (Bt, S*D) slab would require a sublane->lane reshape Mosaic does not
        # reliably lower, and at realistic D >= 128 this store is already
        # lane-dense.
        out_ref[...] = out.reshape(Bt, S, D).astype(out_ref.dtype)

    return kernel


def multi_headed_attention(query, key, value, params, *, h,
                           batch_tile=None, approx_reciprocal=True,
                           return_attn=False):
    """Pallas forward of MultiHeadedAttention.

    query/key/value: (B, S, D) arrays (batch-first, feature-last).
    params: wq,bq,wk,bk,wv,bv,wo,bo in nn.Linear convention (w: (out, in)).
    Returns output (B, S, D); with return_attn=True also returns the attention
    probabilities (B, h, S, S) (== the module's self.attn).
    approx_reciprocal=True injects ~2^-8 relative error into the softmax (and
    hence the returned attention); use False for bit-tight comparisons.
    """
    B, S, D = query.shape
    assert D % h == 0, "d_model must be divisible by h"
    d_k = D // h

    if batch_tile is None:
        # >= 2 grid steps so both v7x TensorCores get work; keep the tile
        # modest (per-step overhead ~0.35us vs. S^2 VMEM + unrolled relayout).
        batch_tile = min(max(1, B // 2), 8)
        while B % batch_tile:
            batch_tile -= 1
    assert B % batch_tile == 0
    num_tiles = B // batch_tile

    in_dtype = query.dtype
    scale = 1.0 / math.sqrt(d_k)

    # Pack the 4 (D, D) weights (transposed for x @ W.T) and 4 biases into
    # two operands; fold 1/sqrt(d_k) into Wq / bq here (host-side weight prep).
    wq = jnp.asarray(params["wq"], jnp.float32) * scale
    wk = jnp.asarray(params["wk"], jnp.float32)
    wv = jnp.asarray(params["wv"], jnp.float32)
    wo = jnp.asarray(params["wo"], jnp.float32)
    w_packed = jnp.stack([wq.T, wk.T, wv.T, wo.T]).astype(in_dtype)   # (4, D, D)

    bq = jnp.asarray(params["bq"], jnp.float32) * scale
    b_packed = jnp.stack([bq,
                          jnp.asarray(params["bk"], jnp.float32),
                          jnp.asarray(params["bv"], jnp.float32),
                          jnp.asarray(params["bo"], jnp.float32)])
    b_packed = b_packed.reshape(4, 1, D)                              # (4, 1, D)

    kernel = _make_mha_kernel(h=h, approx_reciprocal=approx_reciprocal,
                              return_attn=return_attn)

    qkv_spec = pl.BlockSpec((batch_tile, S, D), lambda i: (i, 0, 0))
    out_shapes = [jax.ShapeDtypeStruct((B, S, D), in_dtype)]
    out_specs = [pl.BlockSpec((batch_tile, S, D), lambda i: (i, 0, 0))]
    if return_attn:
        out_shapes.append(jax.ShapeDtypeStruct((B, h, S, S), jnp.float32))
        out_specs.append(pl.BlockSpec((batch_tile, h, S, S),
                                      lambda i: (i, 0, 0, 0)))

    results = pl.pallas_call(
        kernel,
        out_shape=tuple(out_shapes),
        grid_spec=pltpu.PrefetchScalarGridSpec(
            num_scalar_prefetch=0,
            grid=(num_tiles,),
            in_specs=[
                qkv_spec, qkv_spec, qkv_spec,                    # q, k, v
                pl.BlockSpec((4, D, D), lambda i: (0, 0, 0)),    # packed W^T
                pl.BlockSpec((4, 1, D), lambda i: (0, 0, 0)),    # packed biases
            ],
            out_specs=tuple(out_specs),
        ),
        compiler_params=pltpu.CompilerParams(
            dimension_semantics=("parallel",)),
    )(query, key, value, w_packed, b_packed)

    if return_attn:
        return results[0], results[1]
    return results[0]


def _reference_mha(query, key, value, params, *, h):
    """Pure-JAX reference mirroring the PyTorch forward."""
    B, S, D = query.shape
    d_k = D // h

    def lin(x, w, b):
        return x @ w.T + b

    def split_heads(x):  # (B,S,D) -> (B,h,S,d_k)
        return x.reshape(B, S, h, d_k).transpose(0, 2, 1, 3)

    Q = split_heads(lin(query, params["wq"], params["bq"]))
    K = split_heads(lin(key, params["wk"], params["bk"]))
    V = split_heads(lin(value, params["wv"], params["bv"]))

    scores = jnp.einsum("bhqd,bhkd->bhqk", Q, K) / math.sqrt(d_k)
    p = jax.nn.softmax(scores, axis=-1)
    ctx = jnp.einsum("bhqk,bhkd->bhqd", p, V)
    ctx = ctx.transpose(0, 2, 1, 3).reshape(B, S, D)
    return ctx @ params["wo"].T + params["bo"], p


if __name__ == "__main__":
    B, S, D, H = 2, 8, 32, 4   # batch, seq, d_model, heads (d_k = 8)

    key = jax.random.PRNGKey(0)
    ks = jax.random.split(key, 12)

    def linear_init(kw, kb, fan_in, shape_w, shape_b):
        bound = 1.0 / math.sqrt(fan_in)
        w = jax.random.uniform(kw, shape_w, jnp.float32, -bound, bound)
        b = jax.random.uniform(kb, shape_b, jnp.float32, -bound, bound)
        return w, b

    wq, bq = linear_init(ks[0], ks[1], D, (D, D), (D,))
    wk, bk = linear_init(ks[2], ks[3], D, (D, D), (D,))
    wv, bv = linear_init(ks[4], ks[5], D, (D, D), (D,))
    wo, bo = linear_init(ks[6], ks[7], D, (D, D), (D,))
    params = dict(wq=wq, bq=bq, wk=wk, bk=bk, wv=wv, bv=bv, wo=wo, bo=bo)

    query = jax.random.normal(ks[8], (B, S, D), jnp.float32)
    key_in = jax.random.normal(ks[9], (B, S, D), jnp.float32)
    value = jax.random.normal(ks[10], (B, S, D), jnp.float32)

    ref_out, ref_attn = _reference_mha(query, key_in, value, params, h=H)

    # 1) Default fast path: batch_tile=1 -> grid=(2,) ('parallel' -> both v7x
    #    TensorCores), approx EUP reciprocal, no attention output (matches
    #    what forward() actually returns).
    out = multi_headed_attention(query, key_in, value, params, h=H)
    out = jax.block_until_ready(out)
    assert out.shape == (B, S, D)
    assert jnp.allclose(out, ref_out, atol=2e-2, rtol=2e-2), "output mismatch (approx)"

    # 2) Exact-reciprocal path + attention probabilities -> tight check.
    out_x, attn_x = multi_headed_attention(query, key_in, value, params, h=H,
                                           approx_reciprocal=False,
                                           return_attn=True)
    out_x = jax.block_until_ready(out_x)
    attn_x = jax.block_until_ready(attn_x)
    assert attn_x.shape == (B, H, S, S)
    assert jnp.allclose(out_x, ref_out, atol=1e-4, rtol=1e-4), "output mismatch"
    assert jnp.allclose(attn_x, ref_attn, atol=1e-5, rtol=1e-5), "attn mismatch"

    # 3) batch_tile > 1 (single grid step) exercises the unrolled per-batch
    #    relayout path.
    out_b, attn_b = multi_headed_attention(query, key_in, value, params, h=H,
                                           batch_tile=2,
                                           approx_reciprocal=False,
                                           return_attn=True)
    out_b = jax.block_until_ready(out_b)
    attn_b = jax.block_until_ready(attn_b)
    assert jnp.allclose(out_b, ref_out, atol=1e-4, rtol=1e-4), "output mismatch (Bt=2)"
    assert jnp.allclose(attn_b, ref_attn, atol=1e-5, rtol=1e-5), "attn mismatch (Bt=2)"

    print("KERNEL_OK")
</pallas_src>

<mosaic_0001>
module attributes {stable_mosaic.version = 11 : i64} {
  func.func @kernel(%arg0: i32, %arg1: memref<1x8x32xf32, #tpu.memory_space<vmem>>, %arg2: memref<1x8x32xf32, #tpu.memory_space<vmem>>, %arg3: memref<1x8x32xf32, #tpu.memory_space<vmem>>, %arg4: memref<4x32x32xf32, #tpu.memory_space<vmem>>, %arg5: memref<4x1x32xf32, #tpu.memory_space<vmem>>, %arg6: memref<1x8x32xf32, #tpu.memory_space<vmem>>) attributes {dimension_semantics = [#tpu.dimension_semantics<parallel>], iteration_bounds = array<i64: 2>, scalar_prefetch = 0 : i64, scratch_operands = 0 : i64, tpu.core_type = #tpu.core_type<tc>, window_params = [{transform_indices = @transform_0, window_bounds = array<i64: 1, 8, 32>}, {transform_indices = @transform_1, window_bounds = array<i64: 1, 8, 32>}, {transform_indices = @transform_2, window_bounds = array<i64: 1, 8, 32>}, {pipeline_mode = #tpu.pipeline_mode<synchronous>, transform_indices = @transform_3, window_bounds = array<i64: 4, 32, 32>}, {pipeline_mode = #tpu.pipeline_mode<synchronous>, transform_indices = @transform_4, window_bounds = array<i64: 4, 1, 32>}, {transform_indices = @transform_5, window_bounds = array<i64: 1, 8, 32>}]} {
    %c0 = arith.constant 0 : index
    %c0_0 = arith.constant 0 : index
    %c0_1 = arith.constant 0 : index
    %0 = vector.load %arg1[%c0, %c0_0, %c0_1] : memref<1x8x32xf32, #tpu.memory_space<vmem>>, vector<1x8x32xf32>
    %1 = vector.shape_cast %0 : vector<1x8x32xf32> to vector<8x32xf32>
    %c0_2 = arith.constant 0 : index
    %c0_3 = arith.constant 0 : index
    %c0_4 = arith.constant 0 : index
    %2 = vector.load %arg4[%c0_2, %c0_3, %c0_4] : memref<4x32x32xf32, #tpu.memory_space<vmem>>, vector<1x32x32xf32>
    %3 = vector.shape_cast %2 : vector<1x32x32xf32> to vector<32x32xf32>
    %cst = arith.constant dense<0.000000e+00> : vector<8x32xf32>
    %4 = tpu.matmul %1, %3, %cst {dimension_numbers = #tpu.dot_dimension_numbers<[1], [0], [0], [1], [0, 0, 1, 1], [], []>} : vector<8x32xf32>, vector<32x32xf32>, vector<8x32xf32> -> vector<8x32xf32>
    %c0_5 = arith.constant 0 : index
    %c0_6 = arith.constant 0 : index
    %c0_7 = arith.constant 0 : index
    %5 = vector.load %arg5[%c0_5, %c0_6, %c0_7] : memref<4x1x32xf32, #tpu.memory_space<vmem>>, vector<1x1x32xf32>
    %6 = vector.shape_cast %5 : vector<1x1x32xf32> to vector<1x32xf32>
    %7 = vector.broadcast %6 : vector<1x32xf32> to vector<8x32xf32>
    %8 = arith.addf %4, %7 : vector<8x32xf32>
    %9 = vector.shape_cast %8 : vector<8x32xf32> to vector<1x8x32xf32>
    %10 = vector.shape_cast %9 : vector<1x8x32xf32> to vector<8x32xf32>
    %11 = tpu.transpose %10, [1, 0] : vector<8x32xf32> -> vector<32x8xf32>
    %12 = vector.shape_cast %11 : vector<32x8xf32> to vector<1x32x8xf32>
    %13 = vector.shape_cast %12 : vector<1x32x8xf32> to vector<1x4x8x8xf32>
    %14 = vector.shape_cast %13 : vector<1x4x8x8xf32> to vector<4x8x8xf32>
    %c0_8 = arith.constant 0 : index
    %c0_9 = arith.constant 0 : index
    %c0_10 = arith.constant 0 : index
    %15 = vector.load %arg2[%c0_8, %c0_9, %c0_10] : memref<1x8x32xf32, #tpu.memory_space<vmem>>, vector<1x8x32xf32>
    %16 = vector.shape_cast %15 : vector<1x8x32xf32> to vector<8x32xf32>
    %c1 = arith.constant 1 : index
    %c0_11 = arith.constant 0 : index
    %c0_12 = arith.constant 0 : index
    %17 = vector.load %arg4[%c1, %c0_11, %c0_12] : memref<4x32x32xf32, #tpu.memory_space<vmem>>, vector<1x32x32xf32>
    %18 = vector.shape_cast %17 : vector<1x32x32xf32> to vector<32x32xf32>
    %cst_13 = arith.constant dense<0.000000e+00> : vector<8x32xf32>
    %19 = tpu.matmul %16, %18, %cst_13 {dimension_numbers = #tpu.dot_dimension_numbers<[1], [0], [0], [1], [0, 0, 1, 1], [], []>} : vector<8x32xf32>, vector<32x32xf32>, vector<8x32xf32> -> vector<8x32xf32>
    %c1_14 = arith.constant 1 : index
    %c0_15 = arith.constant 0 : index
    %c0_16 = arith.constant 0 : index
    %20 = vector.load %arg5[%c1_14, %c0_15, %c0_16] : memref<4x1x32xf32, #tpu.memory_space<vmem>>, vector<1x1x32xf32>
    %21 = vector.shape_cast %20 : vector<1x1x32xf32> to vector<1x32xf32>
    %22 = vector.broadcast %21 : vector<1x32xf32> to vector<8x32xf32>
    %23 = arith.addf %19, %22 : vector<8x32xf32>
    %24 = vector.shape_cast %23 : vector<8x32xf32> to vector<1x8x32xf32>
    %25 = vector.shape_cast %24 : vector<1x8x32xf32> to vector<8x32xf32>
    %26 = tpu.transpose %25, [1, 0] : vector<8x32xf32> -> vector<32x8xf32>
    %27 = vector.shape_cast %26 : vector<32x8xf32> to vector<1x32x8xf32>
    %28 = vector.shape_cast %27 : vector<1x32x8xf32> to vector<1x4x8x8xf32>
    %29 = vector.shape_cast %28 : vector<1x4x8x8xf32> to vector<4x8x8xf32>
    %c0_17 = arith.constant 0 : index
    %c0_18 = arith.constant 0 : index
    %c0_19 = arith.constant 0 : index
    %30 = vector.load %arg3[%c0_17, %c0_18, %c0_19] : memref<1x8x32xf32, #tpu.memory_space<vmem>>, vector<1x8x32xf32>
    %31 = vector.shape_cast %30 : vector<1x8x32xf32> to vector<8x32xf32>
    %c2 = arith.constant 2 : index
    %c0_20 = arith.constant 0 : index
    %c0_21 = arith.constant 0 : index
    %32 = vector.load %arg4[%c2, %c0_20, %c0_21] : memref<4x32x32xf32, #tpu.memory_space<vmem>>, vector<1x32x32xf32>
    %33 = vector.shape_cast %32 : vector<1x32x32xf32> to vector<32x32xf32>
    %cst_22 = arith.constant dense<0.000000e+00> : vector<8x32xf32>
    %34 = tpu.matmul %31, %33, %cst_22 {dimension_numbers = #tpu.dot_dimension_numbers<[1], [0], [0], [1], [0, 0, 1, 1], [], []>} : vector<8x32xf32>, vector<32x32xf32>, vector<8x32xf32> -> vector<8x32xf32>
    %c2_23 = arith.constant 2 : index
    %c0_24 = arith.constant 0 : index
    %c0_25 = arith.constant 0 : index
    %35 = vector.load %arg5[%c2_23, %c0_24, %c0_25] : memref<4x1x32xf32, #tpu.memory_space<vmem>>, vector<1x1x32xf32>
    %36 = vector.shape_cast %35 : vector<1x1x32xf32> to vector<1x32xf32>
    %37 = vector.broadcast %36 : vector<1x32xf32> to vector<8x32xf32>
    %38 = arith.addf %34, %37 : vector<8x32xf32>
    %39 = vector.shape_cast %38 : vector<8x32xf32> to vector<1x8x32xf32>
    %40 = vector.shape_cast %39 : vector<1x8x32xf32> to vector<8x32xf32>
    %41 = tpu.transpose %40, [1, 0] : vector<8x32xf32> -> vector<32x8xf32>
    %42 = vector.shape_cast %41 : vector<32x8xf32> to vector<1x32x8xf32>
    %43 = vector.shape_cast %42 : vector<1x32x8xf32> to vector<1x4x8x8xf32>
    %44 = vector.shape_cast %43 : vector<1x4x8x8xf32> to vector<4x8x8xf32>
    %cst_26 = arith.constant dense<0.000000e+00> : vector<4x8x8xf32>
    %45 = tpu.matmul %14, %29, %cst_26 {dimension_numbers = #tpu.dot_dimension_numbers<[1], [1], [2], [2], [0, 0, 0, 2, 1, 2], [0], [0]>} : vector<4x8x8xf32>, vector<4x8x8xf32>, vector<4x8x8xf32> -> vector<4x8x8xf32>
    %cst_27 = arith.constant dense<0xFF800000> : vector<4x8xf32>
    %46 = vector.multi_reduction <maximumf>, %45, %cst_27 [2] : vector<4x8x8xf32> to vector<4x8xf32>
    %47 = vector.shape_cast %46 : vector<4x8xf32> to vector<4x8x1xf32>
    %48 = vector.broadcast %47 : vector<4x8x1xf32> to vector<4x8x8xf32>
    %49 = arith.subf %45, %48 : vector<4x8x8xf32>
    %50 = math.exp %49 : vector<4x8x8xf32>
    %cst_28 = arith.constant dense<0.000000e+00> : vector<4x8xf32>
    %51 = vector.multi_reduction <add>, %50, %cst_28 [2] : vector<4x8x8xf32> to vector<4x8xf32>
    %52 = vector.shape_cast %51 : vector<4x8xf32> to vector<4x8x1xf32>
    %53 = tpu.reciprocal %52 {approx = true} : vector<4x8x1xf32> -> vector<4x8x1xf32>
    %54 = vector.broadcast %53 : vector<4x8x1xf32> to vector<4x8x8xf32>
    %55 = arith.mulf %50, %54 : vector<4x8x8xf32>
    %cst_29 = arith.constant dense<0.000000e+00> : vector<4x8x8xf32>
    %56 = tpu.matmul %44, %55, %cst_29 {dimension_numbers = #tpu.dot_dimension_numbers<[2], [2], [1], [1], [0, 0, 0, 1, 1, 1], [0], [0]>} : vector<4x8x8xf32>, vector<4x8x8xf32>, vector<4x8x8xf32> -> vector<4x8x8xf32>
    %57 = vector.shape_cast %56 : vector<4x8x8xf32> to vector<1x4x8x8xf32>
    %58 = vector.shape_cast %57 : vector<1x4x8x8xf32> to vector<1x32x8xf32>
    %59 = vector.shape_cast %58 : vector<1x32x8xf32> to vector<32x8xf32>
    %60 = tpu.transpose %59, [1, 0] : vector<32x8xf32> -> vector<8x32xf32>
    %61 = vector.shape_cast %60 : vector<8x32xf32> to vector<1x8x32xf32>
    %62 = vector.shape_cast %61 : vector<1x8x32xf32> to vector<8x32xf32>
    %c3 = arith.constant 3 : index
    %c0_30 = arith.constant 0 : index
    %c0_31 = arith.constant 0 : index
    %63 = vector.load %arg4[%c3, %c0_30, %c0_31] : memref<4x32x32xf32, #tpu.memory_space<vmem>>, vector<1x32x32xf32>
    %64 = vector.shape_cast %63 : vector<1x32x32xf32> to vector<32x32xf32>
    %cst_32 = arith.constant dense<0.000000e+00> : vector<8x32xf32>
    %65 = tpu.matmul %62, %64, %cst_32 {dimension_numbers = #tpu.dot_dimension_numbers<[1], [0], [0], [1], [0, 0, 1, 1], [], []>} : vector<8x32xf32>, vector<32x32xf32>, vector<8x32xf32> -> vector<8x32xf32>
    %c3_33 = arith.constant 3 : index
    %c0_34 = arith.constant 0 : index
    %c0_35 = arith.constant 0 : index
    %66 = vector.load %arg5[%c3_33, %c0_34, %c0_35] : memref<4x1x32xf32, #tpu.memory_space<vmem>>, vector<1x1x32xf32>
    %67 = vector.shape_cast %66 : vector<1x1x32xf32> to vector<1x32xf32>
    %68 = vector.broadcast %67 : vector<1x32xf32> to vector<8x32xf32>
    %69 = arith.addf %65, %68 : vector<8x32xf32>
    %70 = vector.shape_cast %69 : vector<8x32xf32> to vector<1x8x32xf32>
    %c0_36 = arith.constant 0 : index
    %c0_37 = arith.constant 0 : index
    %c0_38 = arith.constant 0 : index
    %71 = vector.load %arg6[%c0_36, %c0_37, %c0_38] : memref<1x8x32xf32, #tpu.memory_space<vmem>>, vector<1x8x32xf32>
    tpu.vector_store %arg6[%c0_36, %c0_37, %c0_38], %70 {strides = array<i32>} : memref<1x8x32xf32, #tpu.memory_space<vmem>>, vector<1x8x32xf32>,
    return
  }
  func.func @transform_0(%arg0: i32) -> (i32, i32, i32) {
    %c0_i32 = arith.constant 0 : i32
    %c0_i32_0 = arith.constant 0 : i32
    %c0_i32_1 = arith.constant 0 : i32
    return %arg0, %c0_i32, %c0_i32_0 : i32, i32, i32
  }
  func.func @transform_1(%arg0: i32) -> (i32, i32, i32) {
    %c0_i32 = arith.constant 0 : i32
    %c0_i32_0 = arith.constant 0 : i32
    %c0_i32_1 = arith.constant 0 : i32
    return %arg0, %c0_i32, %c0_i32_0 : i32, i32, i32
  }
  func.func @transform_2(%arg0: i32) -> (i32, i32, i32) {
    %c0_i32 = arith.constant 0 : i32
    %c0_i32_0 = arith.constant 0 : i32
    %c0_i32_1 = arith.constant 0 : i32
    return %arg0, %c0_i32, %c0_i32_0 : i32, i32, i32
  }
  func.func @transform_3(%arg0: i32) -> (i32, i32, i32) {
    %c0_i32 = arith.constant 0 : i32
    %c0_i32_0 = arith.constant 0 : i32
    %c0_i32_1 = arith.constant 0 : i32
    %c0_i32_2 = arith.constant 0 : i32
    return %c0_i32, %c0_i32_0, %c0_i32_1 : i32, i32, i32
  }
  func.func @transform_4(%arg0: i32) -> (i32, i32, i32) {
    %c0_i32 = arith.constant 0 : i32
    %c0_i32_0 = arith.constant 0 : i32
    %c0_i32_1 = arith.constant 0 : i32
    %c0_i32_2 = arith.constant 0 : i32
    return %c0_i32, %c0_i32_0, %c0_i32_1 : i32, i32, i32
  }
  func.func @transform_5(%arg0: i32) -> (i32, i32, i32) {
    %c0_i32 = arith.constant 0 : i32
    %c0_i32_0 = arith.constant 0 : i32
    %c0_i32_1 = arith.constant 0 : i32
    return %arg0, %c0_i32, %c0_i32_0 : i32, i32, i32
  }
}

</mosaic_0001>

<llo_original>
// kernel: tpu_custom_call.1
$region0: #{tpu_custom_call.1}
  #allocation0 [shape = 'u32[]', space=smem, size = 0x4, offset = 0x4, fixed_abs, tag = 'smem constant byte address 0x4 - core index']
  #allocation1 [shape = 'u32[144,128]{1,0:T(1,128)}', space=vmem, size = 0x12000, scoped, tag = 'internal scratch']
  %s0 = inlined_call_operand.hbm [shape: f32[2,8,32], index: 0, kind: input, shape index: {}]
  %s1 = inlined_call_operand.hbm [shape: f32[2,8,32], index: 1, kind: input, shape index: {}]
  %s2 = inlined_call_operand.hbm [shape: f32[2,8,32], index: 2, kind: input, shape index: {}]
  %s3 = inlined_call_operand.hbm [shape: f32[4,32,32], index: 3, kind: input, shape index: {}]
  %s4 = inlined_call_operand.vmem [shape: f32[4,1,32], index: 4, kind: input, shape index: {}]
  %s5 = inlined_call_operand.hbm [shape: f32[2,8,32], index: 5, kind: output, shape index: {}]
  %s6 = sld [smem:[#allocation0]]
  $region69: #{tpu_custom_call.1} parent=0
    _
  %s8 = ssub.s32 1, %s6
  %s9 = scalar_select 0, %s8, %s6
  $region1: #{tpu_custom_call.1} parent=0
    #allocation2 [shape = 'u8[8192]{0}', space=vmem, size = 0x2000, scoped, tag = 'input window, operand 0']
    #allocation3 [shape = 's32[2]{0}', space=sflag, size = 0x8, scoped, tag = 'scoped memory for tpu_custom_call.1']
    #allocation4 [shape = 's32[2]{0}', space=sflag, size = 0x8, scoped, tag = 'scoped memory for tpu_custom_call.1']
    #allocation5 [shape = 'u8[8192]{0}', space=vmem, size = 0x2000, scoped, tag = 'input window, operand 1']
    #allocation6 [shape = 's32[2]{0}', space=sflag, size = 0x8, scoped, tag = 'scoped memory for tpu_custom_call.1']
    #allocation7 [shape = 'u8[8192]{0}', space=vmem, size = 0x2000, scoped, tag = 'input window, operand 2']
    #allocation8 [shape = 'u8[65536]{0}', space=vmem, size = 0x10000, scoped, tag = 'input window, operand 3, single buffered']
    #allocation9 [shape = 's32[1]{0}', space=sflag, size = 0x4, scoped, tag = 'scoped memory for tpu_custom_call.1']
    #allocation10 [shape = 'u8[8192]{0}', space=vmem, size = 0x2000, scoped, tag = 'output window, operand 0']
    %10 = vsyncpa [#allocation3], 0
    %s11 = scalar_lea.sflag [#allocation3], 1
    %12 = vsyncpa %s11, 0
    %13 = vsyncpa [#allocation6], 0
    %s14 = scalar_lea.sflag [#allocation6], 1
    %15 = vsyncpa %s14, 0
    %16 = vsyncpa [#allocation9], 0
    %17 = vsyncpa [#allocation4], 0
    %s18 = scalar_lea.sflag [#allocation4], 1
    %19 = vsyncpa %s18, 0
    loop: start=0, step=1, limit=4
    $region2: #{tpu_custom_call.1} parent=1 // loop_pre_header
      _
    $region3: #{tpu_custom_call.1} parent=1 // loop_header
      %s21 = sphi 0, %s25
      %p22 = scmp.ge.s32.totalorder %s21, 4
      %s31 = sphi 0, %s33
      %s34 = sphi 0, %s31
      %s35 = sphi 0, %s34
      %s51 = sphi 0, %s35
      %s57 = sphi 0, %s59
      %s60 = sphi 0, %s57
      %s61 = sphi 0, %s60
      %s77 = sphi 0, %s61
      %s83 = sphi 0, %s85
      %s86 = sphi 0, %s83
      %s87 = sphi 0, %s86
      %s103 = sphi 0, %s87
      %s107 = sphi 0, %s107
      %s109 = sphi 0, %s107
      %s110 = sphi 0, %s109
      %s124 = sphi 0, %s110
      %s128 = sphi 0, %s128
      %s130 = sphi 0, %s128
      %s131 = sphi 0, %s130
      %s145 = sphi 0, %s131
      %s151 = sphi 0, %s153
      %s154 = sphi 0, %s151
      %s155 = sphi 0, %s154
      %s171 = sphi 0, %s155
    $region4: #{tpu_custom_call.1} parent=1 // loop_header_branch
      %24 = sbr.rel (%p22) target = $region8
    $region5: #{tpu_custom_call.1} parent=1 // loop_body
      %s26 = ssub.s32 %s21, 1
      %s27 = ssub.s32 %s21, 2
      %s28 = sadd.s32 %s21, 1
      %s29 = ssub.s32 %s21, %s28
      %p30 = scmp.eq.s32.totalorder %s29, 0
      %s32 = sadd.s32 %s31, 1
      %s33 = scalar_select %p30, %s31, %s32
      %p36 = pneg %p30
      %p37 = scmp.eq.s32.totalorder %s21, 1
      %p38 = por %p36, %p37
      %p39 = scmp.ne.s32.totalorder %s31, %s34
      %p40 = scmp.eq.s32.totalorder %s21, 0
      %p41 = por %p39, %p40
      %p42 = scmp.ne.s32.totalorder %s31, %s34
      %p43 = scmp.eq.s32.totalorder %s26, 1
      %p44 = por %p42, %p43
      %p45 = scmp.ne.s32.totalorder %s34, %s35
      %p46 = scmp.eq.s32.totalorder %s26, 0
      %p47 = por %p45, %p46
      %p48 = scmp.ne.s32.totalorder %s34, %s35
      %p49 = scmp.eq.s32.totalorder %s27, 1
      %p50 = por %p48, %p49
      %p52 = scmp.ne.s32.totalorder %s35, %s51
      %p53 = scmp.eq.s32.totalorder %s27, 0
      %p54 = por %p52, %p53
      %s55 = ssub.s32 %s21, %s28
      %p56 = scmp.eq.s32.totalorder %s55, 0
      %s58 = sadd.s32 %s57, 1
      %s59 = scalar_select %p56, %s57, %s58
      %p62 = pneg %p56
      %p63 = scmp.eq.s32.totalorder %s21, 1
      %p64 = por %p62, %p63
      %p65 = scmp.ne.s32.totalorder %s57, %s60
      %p66 = scmp.eq.s32.totalorder %s21, 0
      %p67 = por %p65, %p66
      %p68 = scmp.ne.s32.totalorder %s57, %s60
      %p69 = scmp.eq.s32.totalorder %s26, 1
      %p70 = por %p68, %p69
      %p71 = scmp.ne.s32.totalorder %s60, %s61
      %p72 = scmp.eq.s32.totalorder %s26, 0
      %p73 = por %p71, %p72
      %p74 = scmp.ne.s32.totalorder %s60, %s61
      %p75 = scmp.eq.s32.totalorder %s27, 1
      %p76 = por %p74, %p75
      %p78 = scmp.ne.s32.totalorder %s61, %s77
      %p79 = scmp.eq.s32.totalorder %s27, 0
      %p80 = por %p78, %p79
      %s81 = ssub.s32 %s21, %s28
      %p82 = scmp.eq.s32.totalorder %s81, 0
      %s84 = sadd.s32 %s83, 1
      %s85 = scalar_select %p82, %s83, %s84
      %p88 = pneg %p82
      %p89 = scmp.eq.s32.totalorder %s21, 1
      %p90 = por %p88, %p89
      %p91 = scmp.ne.s32.totalorder %s83, %s86
      %p92 = scmp.eq.s32.totalorder %s21, 0
      %p93 = por %p91, %p92
      %p94 = scmp.ne.s32.totalorder %s83, %s86
      %p95 = scmp.eq.s32.totalorder %s26, 1
      %p96 = por %p94, %p95
      %p97 = scmp.ne.s32.totalorder %s86, %s87
      %p98 = scmp.eq.s32.totalorder %s26, 0
      %p99 = por %p97, %p98
      %p100 = scmp.ne.s32.totalorder %s86, %s87
      %p101 = scmp.eq.s32.totalorder %s27, 1
      %p102 = por %p100, %p101
      %p104 = scmp.ne.s32.totalorder %s87, %s103
      %p105 = scmp.eq.s32.totalorder %s27, 0
      %p106 = por %p104, %p105
      %s108 = sadd.s32 %s107, 1
      %p111 = scmp.eq.s32.totalorder %s21, 1
      %p112 = scmp.ne.s32.totalorder %s107, %s109
      %p113 = scmp.eq.s32.totalorder %s21, 0
      %p114 = por %p112, %p113
      %p115 = scmp.ne.s32.totalorder %s107, %s109
      %p116 = scmp.eq.s32.totalorder %s26, 1
      %p117 = por %p115, %p116
      %p118 = scmp.ne.s32.totalorder %s109, %s110
      %p119 = scmp.eq.s32.totalorder %s26, 0
      %p120 = por %p118, %p119
      %p121 = scmp.ne.s32.totalorder %s109, %s110
      %p122 = scmp.eq.s32.totalorder %s27, 1
      %p123 = por %p121, %p122
      %p125 = scmp.ne.s32.totalorder %s110, %s124
      %p126 = scmp.eq.s32.totalorder %s27, 0
      %p127 = por %p125, %p126
      %s129 = sadd.s32 %s128, 1
      %p132 = scmp.eq.s32.totalorder %s21, 1
      %p133 = scmp.ne.s32.totalorder %s128, %s130
      %p134 = scmp.eq.s32.totalorder %s21, 0
      %p135 = por %p133, %p134
      %p136 = scmp.ne.s32.totalorder %s128, %s130
      %p137 = scmp.eq.s32.totalorder %s26, 1
      %p138 = por %p136, %p137
      %p139 = scmp.ne.s32.totalorder %s130, %s131
      %p140 = scmp.eq.s32.totalorder %s26, 0
      %p141 = por %p139, %p140
      %p142 = scmp.ne.s32.totalorder %s130, %s131
      %p143 = scmp.eq.s32.totalorder %s27, 1
      %p144 = por %p142, %p143
      %p146 = scmp.ne.s32.totalorder %s131, %s145
      %p147 = scmp.eq.s32.totalorder %s27, 0
      %p148 = por %p146, %p147
      %s149 = ssub.s32 %s21, %s28
      %p150 = scmp.eq.s32.totalorder %s149, 0
      %s152 = sadd.s32 %s151, 1
      %s153 = scalar_select %p150, %s151, %s152
      %p156 = pneg %p150
      %p157 = scmp.eq.s32.totalorder %s21, 1
      %p158 = por %p156, %p157
      %p159 = scmp.ne.s32.totalorder %s151, %s154
      %p160 = scmp.eq.s32.totalorder %s21, 0
      %p161 = por %p159, %p160
      %p162 = scmp.ne.s32.totalorder %s151, %s154
      %p163 = scmp.eq.s32.totalorder %s26, 1
      %p164 = por %p162, %p163
      %p165 = scmp.ne.s32.totalorder %s154, %s155
      %p166 = scmp.eq.s32.totalorder %s26, 0
      %p167 = por %p165, %p166
      %p168 = scmp.ne.s32.totalorder %s154, %s155
      %p169 = scmp.eq.s32.totalorder %s27, 1
      %p170 = por %p168, %p169
      %p172 = scmp.ne.s32.totalorder %s155, %s171
      %p173 = scmp.eq.s32.totalorder %s27, 0
      %p174 = por %p172, %p173
      %p175 = scmp.le.s32.totalorder 1, %s21
      %p176 = scmp.lt.s32.totalorder %s21, 3
      %p177 = pnand %p175, %p176
      %p178 = pneg %p177
      // Predicated region
      $region9: #{tpu_custom_call.1} parent=5 // pred_check
        _
      $region10: #{tpu_custom_call.1} parent=5 // pred_check_branch
        %180 = sbr.rel (%p177) target = $region12
      $region11: #{tpu_custom_call.1} parent=5 // pred_region
        %s181 = ssub.s32 %s21, 1
        // Predicated region
        $region13: #{tpu_custom_call.1} parent=11 // pred_check
          %p182 = pneg %p120
        $region14: #{tpu_custom_call.1} parent=11 // pred_check_branch
          %184 = sbr.rel (%p182) target = $region16
        $region15: #{tpu_custom_call.1} parent=11 // pred_region
          %s186 = ssub.s32 2048, 2048
          %187 = vsyncadd [#allocation9], %s186
          %s188 = sshll.u32 [#allocation8], 4
          %s189 = int_to_ptr.vmem [resolvable:$true] %s188
          %194 = dma.hbm_to_vmem [thread:$0]  %s3, 2048, %s189, [#allocation9], 128, 128, 8
        $region16: #{tpu_custom_call.1} parent=11 // pred_fallthru
          _
        // Predicated region
        $region17: #{tpu_custom_call.1} parent=11 // pred_check
          %p195 = pneg %p141
        $region18: #{tpu_custom_call.1} parent=11 // pred_check_branch
          %197 = sbr.rel (%p195) target = $region20
        $region19: #{tpu_custom_call.1} parent=11 // pred_region
          _
        $region20: #{tpu_custom_call.1} parent=11 // pred_fallthru
          _
      $region12: #{tpu_custom_call.1} parent=5 // pred_fallthru
        _
      %p198 = scmp.lt.s32.totalorder %s21, 2
      // Predicated region
      $region21: #{tpu_custom_call.1} parent=5 // pred_check
        %p199 = pneg %p198
      $region22: #{tpu_custom_call.1} parent=5 // pred_check_branch
        %201 = sbr.rel (%p199) target = $region24
      $region23: #{tpu_custom_call.1} parent=5 // pred_region
        // Predicated region
        $region25: #{tpu_custom_call.1} parent=23 // pred_check
          %p202 = pneg %p41
        $region26: #{tpu_custom_call.1} parent=23 // pred_check_branch
          %204 = sbr.rel (%p202) target = $region28
        $region27: #{tpu_custom_call.1} parent=23 // pred_region
          %s205 = sand.u32 %s31, 1
          %s206 = scalar_lea.sflag [#allocation3], %s205
          %s207 = sand.u32 %s31, 1
          %s208 = smul.addr %s207, 8
          %s209 = scalar_lea.vmem [#allocation2], %s208
          %s211 = ssub.s32 128, 128
          %212 = vsyncadd %s206, %s211
          %s213 = smul.addr %s21, 128
          %s214 = scalar_lea.hbm %s0, %s213
          %s216 = sshll.u32 %s209, 4
          %s217 = int_to_ptr.vmem [resolvable:$true] %s216
          %219 = dma.hbm_to_vmem [thread:$0]  %s214, 128, %s217, %s206
        $region28: #{tpu_custom_call.1} parent=23 // pred_fallthru
          _
        // Predicated region
        $region29: #{tpu_custom_call.1} parent=23 // pred_check
          %p220 = pneg %p67
        $region30: #{tpu_custom_call.1} parent=23 // pred_check_branch
          %222 = sbr.rel (%p220) target = $region32
        $region31: #{tpu_custom_call.1} parent=23 // pred_region
          %s223 = sand.u32 %s21, 1
          %s224 = scalar_lea.sflag [#allocation6], %s223
          %s225 = sand.u32 %s57, 1
          %s226 = smul.addr %s225, 8
          %s227 = scalar_lea.vmem [#allocation5], %s226
          %s229 = ssub.s32 128, 128
          %230 = vsyncadd %s224, %s229
          %s231 = smul.addr %s21, 128
          %s232 = scalar_lea.hbm %s1, %s231
          %s234 = sshll.u32 %s227, 4
          %s235 = int_to_ptr.vmem [resolvable:$true] %s234
          %237 = dma.hbm_to_vmem [thread:$0]  %s232, 128, %s235, %s224
        $region32: #{tpu_custom_call.1} parent=23 // pred_fallthru
          _
        // Predicated region
        $region33: #{tpu_custom_call.1} parent=23 // pred_check
          %p238 = pneg %p93
        $region34: #{tpu_custom_call.1} parent=23 // pred_check_branch
          %240 = sbr.rel (%p238) target = $region36
        $region35: #{tpu_custom_call.1} parent=23 // pred_region
          %s241 = sand.u32 %s21, 1
          %s242 = scalar_lea.sflag [#allocation6], %s241
          %s243 = sand.u32 %s83, 1
          %s244 = smul.addr %s243, 8
          %s245 = scalar_lea.vmem [#allocation7], %s244
          %s247 = ssub.s32 128, 128
          %248 = vsyncadd %s242, %s247
          %s249 = smul.addr %s21, 128
          %s250 = scalar_lea.hbm %s2, %s249
          %s252 = sshll.u32 %s245, 4
          %s253 = int_to_ptr.vmem [resolvable:$true] %s252
          %255 = dma.hbm_to_vmem [thread:$0]  %s250, 128, %s253, %s242
        $region36: #{tpu_custom_call.1} parent=23 // pred_fallthru
          _
      $region24: #{tpu_custom_call.1} parent=5 // pred_fallthru
        _
      %p256 = scmp.le.s32.totalorder 1, %s21
      %p257 = scmp.lt.s32.totalorder %s21, 3
      %p258 = pnand %p256, %p257
      %p259 = pneg %p258
      // Predicated region
      $region37: #{tpu_custom_call.1} parent=5 // pred_check
        _
      $region38: #{tpu_custom_call.1} parent=5 // pred_check_branch
        %261 = sbr.rel (%p258) target = $region40
      $region39: #{tpu_custom_call.1} parent=5 // pred_region
        %s262 = ssub.s32 %s21, 1
        %s263 = sand.u32 %s34, 1
        %s264 = scalar_lea.sflag [#allocation3], %s263
        %s265 = sand.u32 %s34, 1
        %s266 = smul.addr %s265, 8
        %s267 = scalar_lea.vmem [#allocation2], %s266
        // Predicated region
        $region41: #{tpu_custom_call.1} parent=39 // pred_check
          %p268 = pneg %p47
        $region42: #{tpu_custom_call.1} parent=39 // pred_check_branch
          %270 = sbr.rel (%p268) target = $region44
        $region43: #{tpu_custom_call.1} parent=39 // pred_region
          %271 = dma.done %s264, 128
        $region44: #{tpu_custom_call.1} parent=39 // pred_fallthru
          _
        %s272 = sand.u32 %s26, 1
        %s273 = scalar_lea.sflag [#allocation6], %s272
        %s274 = sand.u32 %s60, 1
        %s275 = smul.addr %s274, 8
        %s276 = scalar_lea.vmem [#allocation5], %s275
        // Predicated region
        $region45: #{tpu_custom_call.1} parent=39 // pred_check
          %p277 = pneg %p73
        $region46: #{tpu_custom_call.1} parent=39 // pred_check_branch
          %279 = sbr.rel (%p277) target = $region48
        $region47: #{tpu_custom_call.1} parent=39 // pred_region
          %280 = dma.done %s273, 128
        $region48: #{tpu_custom_call.1} parent=39 // pred_fallthru
          _
        %s281 = sand.u32 %s26, 1
        %s282 = scalar_lea.sflag [#allocation6], %s281
        %s283 = sand.u32 %s86, 1
        %s284 = smul.addr %s283, 8
        %s285 = scalar_lea.vmem [#allocation7], %s284
        // Predicated region
        $region49: #{tpu_custom_call.1} parent=39 // pred_check
          %p286 = pneg %p99
        $region50: #{tpu_custom_call.1} parent=39 // pred_check_branch
          %288 = sbr.rel (%p286) target = $region52
        $region51: #{tpu_custom_call.1} parent=39 // pred_region
          %289 = dma.done %s282, 128
        $region52: #{tpu_custom_call.1} parent=39 // pred_fallthru
          _
        // Predicated region
        $region53: #{tpu_custom_call.1} parent=39 // pred_check
          %p290 = pneg %p120
        $region54: #{tpu_custom_call.1} parent=39 // pred_check_branch
          %292 = sbr.rel (%p290) target = $region56
        $region55: #{tpu_custom_call.1} parent=39 // pred_region
          %293 = dma.done [#allocation9], 2048
        $region56: #{tpu_custom_call.1} parent=39 // pred_fallthru
          _
        %s294 = sand.u32 %s34, 1
        %s295 = scalar_lea.sflag [#allocation3], %s294
        %s296 = sand.u32 %s34, 1
        %s297 = smul.addr %s296, 8
        %s298 = scalar_lea.vmem [#allocation2], %s297
        %p299 = pneg %p47
        %p300 = pneg %p44
        %s301 = sand.u32 %s26, 1
        %s302 = scalar_lea.sflag [#allocation6], %s301
        %s303 = sand.u32 %s60, 1
        %s304 = smul.addr %s303, 8
        %s305 = scalar_lea.vmem [#allocation5], %s304
        %p306 = pneg %p73
        %p307 = pneg %p70
        %s308 = sand.u32 %s26, 1
        %s309 = scalar_lea.sflag [#allocation6], %s308
        %s310 = sand.u32 %s86, 1
        %s311 = smul.addr %s310, 8
        %s312 = scalar_lea.vmem [#allocation7], %s311
        %p313 = pneg %p99
        %p314 = pneg %p96
        %p315 = pneg %p120
        %p316 = pneg %p117
        %p317 = pneg %p141
        %p318 = pneg %p138
        %p319 = pneg %p167
        %p320 = pneg %p164
        %s321 = sand.u32 %s154, 1
        %s322 = scalar_lea.sflag [#allocation4], %s321
        %s323 = sand.u32 %s154, 1
        %s324 = smul.addr %s323, 8
        %s325 = scalar_lea.vmem [#allocation10], %s324
        %v326 = vld [vmem:[%s267] sm:$0xff]
        %v327 = vld [vmem:[#allocation8] sm:$0xff]
        %v328 = vld [vmem:[#allocation8 + $0x8] sm:$0xff]
        %v329 = vld [vmem:[#allocation8 + $0x10] sm:$0xff]
        %v330 = vld [vmem:[#allocation8 + $0x18] sm:$0xff]
        %v331 = vld [vmem:[%s4] sm:$0x1]
        %v333 = vlaneseq
        %v334 = vshrl.u32 %v333, 7
        %v335 = vsub.s32 0, %v334
        %v336 = vrot.slane %v331, %v335
        %vm338 = vcmask 261120
        %v340 = vsel %vm338, %v326, 0
        %342 = vmatprep.subr.mxu0 0.0
        %343 = vmatpush1.msra.mxu0 0.0
        %344 = vmatprep.subr.mxu0 0.0
        %345 = vmatpush1.msra.mxu0 0.0
        %346 = vmatprep.subr.mxu0 0.0
        %347 = vmatpush1.msra.mxu0 0.0
        %348 = vmatprep.subr.mxu0 0.0
        %349 = vmatpush1.msra.mxu0 0.0
        %350 = vmatprep.subr.mxu0 0.0
        %351 = vmatpush1.msra.mxu0 0.0
        %352 = vmatprep.subr.mxu0 0.0
        %353 = vmatpush1.msra.mxu0 0.0
        %354 = vmatprep.subr.mxu0 0.0
        %355 = vmatpush1.msra.mxu0 0.0
        %356 = vmatprep.subr.mxu0 0.0
        %357 = vmatpush1.msra.mxu0 0.0
        %358 = vmatprep.subr.mxu0 0.0
        %359 = vmatpush1.msra.mxu0 0.0
        %360 = vmatprep.subr.mxu0 0.0
        %361 = vmatpush1.msra.mxu0 0.0
        %362 = vmatprep.subr.mxu0 0.0
        %363 = vmatpush1.msra.mxu0 0.0
        %364 = vmatprep.subr.mxu0 0.0
        %365 = vmatpush1.msra.mxu0 0.0
        %366 = vmatprep.subr.mxu0 0.0
        %367 = vmatpush1.msra.mxu0 %v330
        %368 = vmatprep.subr.mxu0 0.0
        %369 = vmatpush1.msra.mxu0 %v329
        %370 = vmatprep.subr.mxu0 0.0
        %371 = vmatpush1.msra.mxu0 %v328
        %372 = vmatprep.subr.mxu0 0.0
        %373 = vmatpush1.msra.mxu0 %v327
        %374 = vmatprep.subr.mxu0 0.0
        %375 = vmatpush2.msra.mxu0 0.0
        %376 = vmatprep.subr.mxu0 0.0
        %377 = vmatpush2.msra.mxu0 0.0
        %378 = vmatprep.subr.mxu0 0.0
        %379 = vmatpush2.msra.mxu0 0.0
        %380 = vmatprep.subr.mxu0 0.0
        %381 = vmatpush2.msra.mxu0 0.0
        %382 = vmatprep.subr.mxu0 0.0
        %383 = vmatpush2.msra.mxu0 0.0
        %384 = vmatprep.subr.mxu0 0.0
        %385 = vmatpush2.msra.mxu0 0.0
        %386 = vmatprep.subr.mxu0 0.0
        %387 = vmatpush2.msra.mxu0 0.0
        %388 = vmatprep.subr.mxu0 0.0
        %389 = vmatpush2.msra.mxu0 0.0
        %390 = vmatprep.subr.mxu0 0.0
        %391 = vmatpush2.msra.mxu0 0.0
        %392 = vmatprep.subr.mxu0 0.0
        %393 = vmatpush2.msra.mxu0 0.0
        %394 = vmatprep.subr.mxu0 0.0
        %395 = vmatpush2.msra.mxu0 0.0
        %396 = vmatprep.subr.mxu0 0.0
        %397 = vmatpush2.msra.mxu0 0.0
        %398 = vmatprep.subr.mxu0 0.0
        %399 = vmatpush2.msra.mxu0 0.0
        %400 = vmatprep.subr.mxu0 0.0
        %401 = vmatpush2.msra.mxu0 0.0
        %402 = vmatprep.subr.mxu0 0.0
        %403 = vmatpush2.msra.mxu0 0.0
        %404 = vmatprep.subr.mxu0 0.0
        %405 = vmatpush2.msra.mxu0 0.0
        %406 = vmatprep.mubr.f32.mxu0 0.0
        %407 = vmatmul.mubr.f32.gmra.mxu0 %v340
        %v408 = vpop.f32.mrf.mxu0
        %v409 = vadd.f32 %v336, %v408
        %v410 = vpop.f32.mrf.mxu0
        %411 = vdwg.mxu0
        %412 = vxpose.xlu0.b32.start [1/16] %v409, 128
        %413 = vxpose.xlu0.b32.cont [2/16] 0.0, 128
        %414 = vxpose.xlu0.b32.cont [3/16] 0.0, 128
        %415 = vxpose.xlu0.b32.cont [4/16] 0.0, 128
        %416 = vxpose.xlu0.b32.cont [5/16] 0.0, 128
        %417 = vxpose.xlu0.b32.cont [6/16] 0.0, 128
        %418 = vxpose.xlu0.b32.cont [7/16] 0.0, 128
        %419 = vxpose.xlu0.b32.cont [8/16] 0.0, 128
        %420 = vxpose.xlu0.b32.cont [9/16] 0.0, 128
        %421 = vxpose.xlu0.b32.cont [10/16] 0.0, 128
        %422 = vxpose.xlu0.b32.cont [11/16] 0.0, 128
        %423 = vxpose.xlu0.b32.cont [12/16] 0.0, 128
        %424 = vxpose.xlu0.b32.cont [13/16] 0.0, 128
        %425 = vxpose.xlu0.b32.cont [14/16] 0.0, 128
        %426 = vxpose.xlu0.b32.cont [15/16] 0.0, 128
        %427 = vxpose.xlu0.b32.end [16/16] 0.0, 128
        %v428 = vpop.trf.xlu0
        %v429 = vpop.trf.xlu0
        %v430 = vpop.trf.xlu0
        %v431 = vpop.trf.xlu0
        %v432 = vpop.trf.xlu0
        %v433 = vpop.trf.xlu0
        %v434 = vpop.trf.xlu0
        %v435 = vpop.trf.xlu0
        %v436 = vpop.trf.xlu0
        %v437 = vpop.trf.xlu0
        %v438 = vpop.trf.xlu0
        %v439 = vpop.trf.xlu0
        %v440 = vpop.trf.xlu0
        %v441 = vpop.trf.xlu0
        %v442 = vpop.trf.xlu0
        %v443 = vpop.trf.xlu0
        %v444 = vld [vmem:[%s276] sm:$0xff]
        %s445 = scalar_lea.vmem [#allocation8], 32
        %v446 = vld [vmem:[%s445] sm:$0xff]
        %v447 = vld [vmem:[%s445 + $0x8] sm:$0xff]
        %v448 = vld [vmem:[%s445 + $0x10] sm:$0xff]
        %v449 = vld [vmem:[%s445 + $0x18] sm:$0xff]
        %s450 = scalar_lea.vmem %s4, 1
        %v451 = vld [vmem:[%s450] sm:$0x1]
        %v453 = vlaneseq
        %v454 = vshrl.u32 %v453, 7
        %v455 = vsub.s32 0, %v454
        %v456 = vrot.slane %v451, %v455
        %v459 = vsel %vm338, %v444, 0
        %461 = vmatprep.subr.mxu0 0.0
        %462 = vmatpush1.msra.mxu0 0.0
        %463 = vmatprep.subr.mxu0 0.0
        %464 = vmatpush1.msra.mxu0 0.0
        %465 = vmatprep.subr.mxu0 0.0
        %466 = vmatpush1.msra.mxu0 0.0
        %467 = vmatprep.subr.mxu0 0.0
        %468 = vmatpush1.msra.mxu0 0.0
        %469 = vmatprep.subr.mxu0 0.0
        %470 = vmatpush1.msra.mxu0 0.0
        %471 = vmatprep.subr.mxu0 0.0
        %472 = vmatpush1.msra.mxu0 0.0
        %473 = vmatprep.subr.mxu0 0.0
        %474 = vmatpush1.msra.mxu0 0.0
        %475 = vmatprep.subr.mxu0 0.0
        %476 = vmatpush1.msra.mxu0 0.0
        %477 = vmatprep.subr.mxu0 0.0
        %478 = vmatpush1.msra.mxu0 0.0
        %479 = vmatprep.subr.mxu0 0.0
        %480 = vmatpush1.msra.mxu0 0.0
        %481 = vmatprep.subr.mxu0 0.0
        %482 = vmatpush1.msra.mxu0 0.0
        %483 = vmatprep.subr.mxu0 0.0
        %484 = vmatpush1.msra.mxu0 0.0
        %485 = vmatprep.subr.mxu0 0.0
        %486 = vmatpush1.msra.mxu0 %v449
        %487 = vmatprep.subr.mxu0 0.0
        %488 = vmatpush1.msra.mxu0 %v448
        %489 = vmatprep.subr.mxu0 0.0
        %490 = vmatpush1.msra.mxu0 %v447
        %491 = vmatprep.subr.mxu0 0.0
        %492 = vmatpush1.msra.mxu0 %v446
        %493 = vmatprep.subr.mxu0 0.0
        %494 = vmatpush2.msra.mxu0 0.0
        %495 = vmatprep.subr.mxu0 0.0
        %496 = vmatpush2.msra.mxu0 0.0
        %497 = vmatprep.subr.mxu0 0.0
        %498 = vmatpush2.msra.mxu0 0.0
        %499 = vmatprep.subr.mxu0 0.0
        %500 = vmatpush2.msra.mxu0 0.0
        %501 = vmatprep.subr.mxu0 0.0
        %502 = vmatpush2.msra.mxu0 0.0
        %503 = vmatprep.subr.mxu0 0.0
        %504 = vmatpush2.msra.mxu0 0.0
        %505 = vmatprep.subr.mxu0 0.0
        %506 = vmatpush2.msra.mxu0 0.0
        %507 = vmatprep.subr.mxu0 0.0
        %508 = vmatpush2.msra.mxu0 0.0
        %509 = vmatprep.subr.mxu0 0.0
        %510 = vmatpush2.msra.mxu0 0.0
        %511 = vmatprep.subr.mxu0 0.0
        %512 = vmatpush2.msra.mxu0 0.0
        %513 = vmatprep.subr.mxu0 0.0
        %514 = vmatpush2.msra.mxu0 0.0
        %515 = vmatprep.subr.mxu0 0.0
        %516 = vmatpush2.msra.mxu0 0.0
        %517 = vmatprep.subr.mxu0 0.0
        %518 = vmatpush2.msra.mxu0 0.0
        %519 = vmatprep.subr.mxu0 0.0
        %520 = vmatpush2.msra.mxu0 0.0
        %521 = vmatprep.subr.mxu0 0.0
        %522 = vmatpush2.msra.mxu0 0.0
        %523 = vmatprep.subr.mxu0 0.0
        %524 = vmatpush2.msra.mxu0 0.0
        %525 = vmatprep.mubr.f32.mxu0 0.0
        %526 = vmatmul.mubr.f32.gmra.mxu0 %v459
        %v527 = vpop.f32.mrf.mxu0
        %v528 = vadd.f32 %v456, %v527
        %v529 = vpop.f32.mrf.mxu0
        %530 = vdwg.mxu0
        %531 = vxpose.xlu0.b32.start [1/16] %v528, 128
        %532 = vxpose.xlu0.b32.cont [2/16] 0.0, 128
        %533 = vxpose.xlu0.b32.cont [3/16] 0.0, 128
        %534 = vxpose.xlu0.b32.cont [4/16] 0.0, 128
        %535 = vxpose.xlu0.b32.cont [5/16] 0.0, 128
        %536 = vxpose.xlu0.b32.cont [6/16] 0.0, 128
        %537 = vxpose.xlu0.b32.cont [7/16] 0.0, 128
        %538 = vxpose.xlu0.b32.cont [8/16] 0.0, 128
        %539 = vxpose.xlu0.b32.cont [9/16] 0.0, 128
        %540 = vxpose.xlu0.b32.cont [10/16] 0.0, 128
        %541 = vxpose.xlu0.b32.cont [11/16] 0.0, 128
        %542 = vxpose.xlu0.b32.cont [12/16] 0.0, 128
        %543 = vxpose.xlu0.b32.cont [13/16] 0.0, 128
        %544 = vxpose.xlu0.b32.cont [14/16] 0.0, 128
        %545 = vxpose.xlu0.b32.cont [15/16] 0.0, 128
        %546 = vxpose.xlu0.b32.end [16/16] 0.0, 128
        %v547 = vpop.trf.xlu0
        %v548 = vpop.trf.xlu0
        %v549 = vpop.trf.xlu0
        %v550 = vpop.trf.xlu0
        %v551 = vpop.trf.xlu0
        %v552 = vpop.trf.xlu0
        %v553 = vpop.trf.xlu0
        %v554 = vpop.trf.xlu0
        %v555 = vpop.trf.xlu0
        %v556 = vpop.trf.xlu0
        %v557 = vpop.trf.xlu0
        %v558 = vpop.trf.xlu0
        %v559 = vpop.trf.xlu0
        %v560 = vpop.trf.xlu0
        %v561 = vpop.trf.xlu0
        %v562 = vpop.trf.xlu0
        %v563 = vld [vmem:[%s285] sm:$0xff]
        %s564 = scalar_lea.vmem [#allocation8], 64
        %v565 = vld [vmem:[%s564] sm:$0xff]
        %v566 = vld [vmem:[%s564 + $0x8] sm:$0xff]
        %v567 = vld [vmem:[%s564 + $0x10] sm:$0xff]
        %v568 = vld [vmem:[%s564 + $0x18] sm:$0xff]
        %s569 = scalar_lea.vmem %s4, 2
        %v570 = vld [vmem:[%s569] sm:$0x1]
        %v572 = vlaneseq
        %v573 = vshrl.u32 %v572, 7
        %v574 = vsub.s32 0, %v573
        %v575 = vrot.slane %v570, %v574
        %v578 = vsel %vm338, %v563, 0
        %580 = vmatprep.subr.mxu0 0.0
        %581 = vmatpush1.msra.mxu0 0.0
        %582 = vmatprep.subr.mxu0 0.0
        %583 = vmatpush1.msra.mxu0 0.0
        %584 = vmatprep.subr.mxu0 0.0
        %585 = vmatpush1.msra.mxu0 0.0
        %586 = vmatprep.subr.mxu0 0.0
        %587 = vmatpush1.msra.mxu0 0.0
        %588 = vmatprep.subr.mxu0 0.0
        %589 = vmatpush1.msra.mxu0 0.0
        %590 = vmatprep.subr.mxu0 0.0
        %591 = vmatpush1.msra.mxu0 0.0
        %592 = vmatprep.subr.mxu0 0.0
        %593 = vmatpush1.msra.mxu0 0.0
        %594 = vmatprep.subr.mxu0 0.0
        %595 = vmatpush1.msra.mxu0 0.0
        %596 = vmatprep.subr.mxu0 0.0
        %597 = vmatpush1.msra.mxu0 0.0
        %598 = vmatprep.subr.mxu0 0.0
        %599 = vmatpush1.msra.mxu0 0.0
        %600 = vmatprep.subr.mxu0 0.0
        %601 = vmatpush1.msra.mxu0 0.0
        %602 = vmatprep.subr.mxu0 0.0
        %603 = vmatpush1.msra.mxu0 0.0
        %604 = vmatprep.subr.mxu0 0.0
        %605 = vmatpush1.msra.mxu0 %v568
        %606 = vmatprep.subr.mxu0 0.0
        %607 = vmatpush1.msra.mxu0 %v567
        %608 = vmatprep.subr.mxu0 0.0
        %609 = vmatpush1.msra.mxu0 %v566
        %610 = vmatprep.subr.mxu0 0.0
        %611 = vmatpush1.msra.mxu0 %v565
        %612 = vmatprep.subr.mxu0 0.0
        %613 = vmatpush2.msra.mxu0 0.0
        %614 = vmatprep.subr.mxu0 0.0
        %615 = vmatpush2.msra.mxu0 0.0
        %616 = vmatprep.subr.mxu0 0.0
        %617 = vmatpush2.msra.mxu0 0.0
        %618 = vmatprep.subr.mxu0 0.0
        %619 = vmatpush2.msra.mxu0 0.0
        %620 = vmatprep.subr.mxu0 0.0
        %621 = vmatpush2.msra.mxu0 0.0
        %622 = vmatprep.subr.mxu0 0.0
        %623 = vmatpush2.msra.mxu0 0.0
        %624 = vmatprep.subr.mxu0 0.0
        %625 = vmatpush2.msra.mxu0 0.0
        %626 = vmatprep.subr.mxu0 0.0
        %627 = vmatpush2.msra.mxu0 0.0
        %628 = vmatprep.subr.mxu0 0.0
        %629 = vmatpush2.msra.mxu0 0.0
        %630 = vmatprep.subr.mxu0 0.0
        %631 = vmatpush2.msra.mxu0 0.0
        %632 = vmatprep.subr.mxu0 0.0
        %633 = vmatpush2.msra.mxu0 0.0
        %634 = vmatprep.subr.mxu0 0.0
        %635 = vmatpush2.msra.mxu0 0.0
        %636 = vmatprep.subr.mxu0 0.0
        %637 = vmatpush2.msra.mxu0 0.0
        %638 = vmatprep.subr.mxu0 0.0
        %639 = vmatpush2.msra.mxu0 0.0
        %640 = vmatprep.subr.mxu0 0.0
        %641 = vmatpush2.msra.mxu0 0.0
        %642 = vmatprep.subr.mxu0 0.0
        %643 = vmatpush2.msra.mxu0 0.0
        %644 = vmatprep.mubr.f32.mxu0 0.0
        %645 = vmatmul.mubr.f32.gmra.mxu0 %v578
        %v646 = vpop.f32.mrf.mxu0
        %v647 = vadd.f32 %v575, %v646
        %v648 = vpop.f32.mrf.mxu0
        %649 = vdwg.mxu0
        %650 = vxpose.xlu0.b32.start [1/16] %v647, 128
        %651 = vxpose.xlu0.b32.cont [2/16] 0.0, 128
        %652 = vxpose.xlu0.b32.cont [3/16] 0.0, 128
        %653 = vxpose.xlu0.b32.cont [4/16] 0.0, 128
        %654 = vxpose.xlu0.b32.cont [5/16] 0.0, 128
        %655 = vxpose.xlu0.b32.cont [6/16] 0.0, 128
        %656 = vxpose.xlu0.b32.cont [7/16] 0.0, 128
        %657 = vxpose.xlu0.b32.cont [8/16] 0.0, 128
        %658 = vxpose.xlu0.b32.cont [9/16] 0.0, 128
        %659 = vxpose.xlu0.b32.cont [10/16] 0.0, 128
        %660 = vxpose.xlu0.b32.cont [11/16] 0.0, 128
        %661 = vxpose.xlu0.b32.cont [12/16] 0.0, 128
        %662 = vxpose.xlu0.b32.cont [13/16] 0.0, 128
        %663 = vxpose.xlu0.b32.cont [14/16] 0.0, 128
        %664 = vxpose.xlu0.b32.cont [15/16] 0.0, 128
        %665 = vxpose.xlu0.b32.end [16/16] 0.0, 128
        %v666 = vpop.trf.xlu0
        %v667 = vpop.trf.xlu0
        %v668 = vpop.trf.xlu0
        %v669 = vpop.trf.xlu0
        %v670 = vpop.trf.xlu0
        %v671 = vpop.trf.xlu0
        %v672 = vpop.trf.xlu0
        %v673 = vpop.trf.xlu0
        %v674 = vpop.trf.xlu0
        %v675 = vpop.trf.xlu0
        %v676 = vpop.trf.xlu0
        %v677 = vpop.trf.xlu0
        %v678 = vpop.trf.xlu0
        %v679 = vpop.trf.xlu0
        %v680 = vpop.trf.xlu0
        %v681 = vpop.trf.xlu0
        %682 = vxpose.xlu0.b32.start [1/16] %v428, 128
        %683 = vxpose.xlu0.b32.cont [2/16] 0.0, 128
        %684 = vxpose.xlu0.b32.cont [3/16] 0.0, 128
        %685 = vxpose.xlu0.b32.cont [4/16] 0.0, 128
        %686 = vxpose.xlu0.b32.cont [5/16] 0.0, 128
        %687 = vxpose.xlu0.b32.cont [6/16] 0.0, 128
        %688 = vxpose.xlu0.b32.cont [7/16] 0.0, 128
        %689 = vxpose.xlu0.b32.cont [8/16] 0.0, 128
        %690 = vxpose.xlu0.b32.cont [9/16] 0.0, 128
        %691 = vxpose.xlu0.b32.cont [10/16] 0.0, 128
        %692 = vxpose.xlu0.b32.cont [11/16] 0.0, 128
        %693 = vxpose.xlu0.b32.cont [12/16] 0.0, 128
        %694 = vxpose.xlu0.b32.cont [13/16] 0.0, 128
        %695 = vxpose.xlu0.b32.cont [14/16] 0.0, 128
        %696 = vxpose.xlu0.b32.cont [15/16] 0.0, 128
        %697 = vxpose.xlu0.b32.end [16/16] 0.0, 128
        %v698 = vpop.trf.xlu0
        %v699 = vpop.trf.xlu0
        %v700 = vpop.trf.xlu0
        %v701 = vpop.trf.xlu0
        %v702 = vpop.trf.xlu0
        %v703 = vpop.trf.xlu0
        %v704 = vpop.trf.xlu0
        %v705 = vpop.trf.xlu0
        %v706 = vpop.trf.xlu0
        %v707 = vpop.trf.xlu0
        %v708 = vpop.trf.xlu0
        %v709 = vpop.trf.xlu0
        %v710 = vpop.trf.xlu0
        %v711 = vpop.trf.xlu0
        %v712 = vpop.trf.xlu0
        %v713 = vpop.trf.xlu0
        %vm714 = vcmask 64512
        %v716 = vsel %vm714, %v698, 0
        %718 = vmatprep.subr.mxu0 0.0
        %719 = vmatpush1.msra.mxu0 0.0
        %720 = vmatprep.subr.mxu0 0.0
        %721 = vmatpush1.msra.mxu0 0.0
        %722 = vmatprep.subr.mxu0 0.0
        %723 = vmatpush1.msra.mxu0 0.0
        %724 = vmatprep.subr.mxu0 0.0
        %725 = vmatpush1.msra.mxu0 0.0
        %726 = vmatprep.subr.mxu0 0.0
        %727 = vmatpush1.msra.mxu0 0.0
        %728 = vmatprep.subr.mxu0 0.0
        %729 = vmatpush1.msra.mxu0 0.0
        %730 = vmatprep.subr.mxu0 0.0
        %731 = vmatpush1.msra.mxu0 0.0
        %732 = vmatprep.subr.mxu0 0.0
        %733 = vmatpush1.msra.mxu0 0.0
        %734 = vmatprep.subr.mxu0 0.0
        %735 = vmatpush1.msra.mxu0 0.0
        %736 = vmatprep.subr.mxu0 0.0
        %737 = vmatpush1.msra.mxu0 0.0
        %738 = vmatprep.subr.mxu0 0.0
        %739 = vmatpush1.msra.mxu0 0.0
        %740 = vmatprep.subr.mxu0 0.0
        %741 = vmatpush1.msra.mxu0 0.0
        %742 = vmatprep.subr.mxu0 0.0
        %743 = vmatpush1.msra.mxu0 0.0
        %744 = vmatprep.subr.mxu0 0.0
        %745 = vmatpush1.msra.mxu0 0.0
        %746 = vmatprep.subr.mxu0 0.0
        %747 = vmatpush1.msra.mxu0 0.0
        %748 = vmatprep.subr.mxu0 0.0
        %749 = vmatpush1.msra.mxu0 %v547
        %750 = vmatprep.subr.mxu0 0.0
        %751 = vmatpush2.msra.mxu0 0.0
        %752 = vmatprep.subr.mxu0 0.0
        %753 = vmatpush2.msra.mxu0 0.0
        %754 = vmatprep.subr.mxu0 0.0
        %755 = vmatpush2.msra.mxu0 0.0
        %756 = vmatprep.subr.mxu0 0.0
        %757 = vmatpush2.msra.mxu0 0.0
        %758 = vmatprep.subr.mxu0 0.0
        %759 = vmatpush2.msra.mxu0 0.0
        %760 = vmatprep.subr.mxu0 0.0
        %761 = vmatpush2.msra.mxu0 0.0
        %762 = vmatprep.subr.mxu0 0.0
        %763 = vmatpush2.msra.mxu0 0.0
        %764 = vmatprep.subr.mxu0 0.0
        %765 = vmatpush2.msra.mxu0 0.0
        %766 = vmatprep.subr.mxu0 0.0
        %767 = vmatpush2.msra.mxu0 0.0
        %768 = vmatprep.subr.mxu0 0.0
        %769 = vmatpush2.msra.mxu0 0.0
        %770 = vmatprep.subr.mxu0 0.0
        %771 = vmatpush2.msra.mxu0 0.0
        %772 = vmatprep.subr.mxu0 0.0
        %773 = vmatpush2.msra.mxu0 0.0
        %774 = vmatprep.subr.mxu0 0.0
        %775 = vmatpush2.msra.mxu0 0.0
        %776 = vmatprep.subr.mxu0 0.0
        %777 = vmatpush2.msra.mxu0 0.0
        %778 = vmatprep.subr.mxu0 0.0
        %779 = vmatpush2.msra.mxu0 0.0
        %780 = vmatprep.subr.mxu0 0.0
        %781 = vmatpush2.msra.mxu0 0.0
        %782 = vmatprep.mubr.f32.mxu0 0.0
        %783 = vmatmul.mubr.f32.gmra.mxu0 %v716
        %v784 = vpop.f32.mrf.mxu0
        %v785 = vadd.f32 0.0, %v784
        %v786 = vpop.f32.mrf.mxu0
        %787 = vdwg.mxu0
        %788 = vxpose.xlu0.b32.start [1/16] %v429, 128
        %789 = vxpose.xlu0.b32.cont [2/16] 0.0, 128
        %790 = vxpose.xlu0.b32.cont [3/16] 0.0, 128
        %791 = vxpose.xlu0.b32.cont [4/16] 0.0, 128
        %792 = vxpose.xlu0.b32.cont [5/16] 0.0, 128
        %793 = vxpose.xlu0.b32.cont [6/16] 0.0, 128
        %794 = vxpose.xlu0.b32.cont [7/16] 0.0, 128
        %795 = vxpose.xlu0.b32.cont [8/16] 0.0, 128
        %796 = vxpose.xlu0.b32.cont [9/16] 0.0, 128
        %797 = vxpose.xlu0.b32.cont [10/16] 0.0, 128
        %798 = vxpose.xlu0.b32.cont [11/16] 0.0, 128
        %799 = vxpose.xlu0.b32.cont [12/16] 0.0, 128
        %800 = vxpose.xlu0.b32.cont [13/16] 0.0, 128
        %801 = vxpose.xlu0.b32.cont [14/16] 0.0, 128
        %802 = vxpose.xlu0.b32.cont [15/16] 0.0, 128
        %803 = vxpose.xlu0.b32.end [16/16] 0.0, 128
        %v804 = vpop.trf.xlu0
        %v805 = vpop.trf.xlu0
        %v806 = vpop.trf.xlu0
        %v807 = vpop.trf.xlu0
        %v808 = vpop.trf.xlu0
        %v809 = vpop.trf.xlu0
        %v810 = vpop.trf.xlu0
        %v811 = vpop.trf.xlu0
        %v812 = vpop.trf.xlu0
        %v813 = vpop.trf.xlu0
        %v814 = vpop.trf.xlu0
        %v815 = vpop.trf.xlu0
        %v816 = vpop.trf.xlu0
        %v817 = vpop.trf.xlu0
        %v818 = vpop.trf.xlu0
        %v819 = vpop.trf.xlu0
        %v821 = vsel %vm714, %v804, 0
        %823 = vmatprep.subr.mxu0 0.0
        %824 = vmatpush1.msra.mxu0 0.0
        %825 = vmatprep.subr.mxu0 0.0
        %826 = vmatpush1.msra.mxu0 0.0
        %827 = vmatprep.subr.mxu0 0.0
        %828 = vmatpush1.msra.mxu0 0.0
        %829 = vmatprep.subr.mxu0 0.0
        %830 = vmatpush1.msra.mxu0 0.0
        %831 = vmatprep.subr.mxu0 0.0
        %832 = vmatpush1.msra.mxu0 0.0
        %833 = vmatprep.subr.mxu0 0.0
        %834 = vmatpush1.msra.mxu0 0.0
        %835 = vmatprep.subr.mxu0 0.0
        %836 = vmatpush1.msra.mxu0 0.0
        %837 = vmatprep.subr.mxu0 0.0
        %838 = vmatpush1.msra.mxu0 0.0
        %839 = vmatprep.subr.mxu0 0.0
        %840 = vmatpush1.msra.mxu0 0.0
        %841 = vmatprep.subr.mxu0 0.0
        %842 = vmatpush1.msra.mxu0 0.0
        %843 = vmatprep.subr.mxu0 0.0
        %844 = vmatpush1.msra.mxu0 0.0
        %845 = vmatprep.subr.mxu0 0.0
        %846 = vmatpush1.msra.mxu0 0.0
        %847 = vmatprep.subr.mxu0 0.0
        %848 = vmatpush1.msra.mxu0 0.0
        %849 = vmatprep.subr.mxu0 0.0
        %850 = vmatpush1.msra.mxu0 0.0
        %851 = vmatprep.subr.mxu0 0.0
        %852 = vmatpush1.msra.mxu0 0.0
        %853 = vmatprep.subr.mxu0 0.0
        %854 = vmatpush1.msra.mxu0 %v548
        %855 = vmatprep.subr.mxu0 0.0
        %856 = vmatpush2.msra.mxu0 0.0
        %857 = vmatprep.subr.mxu0 0.0
        %858 = vmatpush2.msra.mxu0 0.0
        %859 = vmatprep.subr.mxu0 0.0
        %860 = vmatpush2.msra.mxu0 0.0
        %861 = vmatprep.subr.mxu0 0.0
        %862 = vmatpush2.msra.mxu0 0.0
        %863 = vmatprep.subr.mxu0 0.0
        %864 = vmatpush2.msra.mxu0 0.0
        %865 = vmatprep.subr.mxu0 0.0
        %866 = vmatpush2.msra.mxu0 0.0
        %867 = vmatprep.subr.mxu0 0.0
        %868 = vmatpush2.msra.mxu0 0.0
        %869 = vmatprep.subr.mxu0 0.0
        %870 = vmatpush2.msra.mxu0 0.0
        %871 = vmatprep.subr.mxu0 0.0
        %872 = vmatpush2.msra.mxu0 0.0
        %873 = vmatprep.subr.mxu0 0.0
        %874 = vmatpush2.msra.mxu0 0.0
        %875 = vmatprep.subr.mxu0 0.0
        %876 = vmatpush2.msra.mxu0 0.0
        %877 = vmatprep.subr.mxu0 0.0
        %878 = vmatpush2.msra.mxu0 0.0
        %879 = vmatprep.subr.mxu0 0.0
        %880 = vmatpush2.msra.mxu0 0.0
        %881 = vmatprep.subr.mxu0 0.0
        %882 = vmatpush2.msra.mxu0 0.0
        %883 = vmatprep.subr.mxu0 0.0
        %884 = vmatpush2.msra.mxu0 0.0
        %885 = vmatprep.subr.mxu0 0.0
        %886 = vmatpush2.msra.mxu0 0.0
        %887 = vmatprep.mubr.f32.mxu0 0.0
        %888 = vmatmul.mubr.f32.gmra.mxu0 %v821
        %v889 = vpop.f32.mrf.mxu0
        %v890 = vadd.f32 0.0, %v889
        %v891 = vpop.f32.mrf.mxu0
        %892 = vdwg.mxu0
        %893 = vxpose.xlu0.b32.start [1/16] %v430, 128
        %894 = vxpose.xlu0.b32.cont [2/16] 0.0, 128
        %895 = vxpose.xlu0.b32.cont [3/16] 0.0, 128
        %896 = vxpose.xlu0.b32.cont [4/16] 0.0, 128
        %897 = vxpose.xlu0.b32.cont [5/16] 0.0, 128
        %898 = vxpose.xlu0.b32.cont [6/16] 0.0, 128
        %899 = vxpose.xlu0.b32.cont [7/16] 0.0, 128
        %900 = vxpose.xlu0.b32.cont [8/16] 0.0, 128
        %901 = vxpose.xlu0.b32.cont [9/16] 0.0, 128
        %902 = vxpose.xlu0.b32.cont [10/16] 0.0, 128
        %903 = vxpose.xlu0.b32.cont [11/16] 0.0, 128
        %904 = vxpose.xlu0.b32.cont [12/16] 0.0, 128
        %905 = vxpose.xlu0.b32.cont [13/16] 0.0, 128
        %906 = vxpose.xlu0.b32.cont [14/16] 0.0, 128
        %907 = vxpose.xlu0.b32.cont [15/16] 0.0, 128
        %908 = vxpose.xlu0.b32.end [16/16] 0.0, 128
        %v909 = vpop.trf.xlu0
        %v910 = vpop.trf.xlu0
        %v911 = vpop.trf.xlu0
        %v912 = vpop.trf.xlu0
        %v913 = vpop.trf.xlu0
        %v914 = vpop.trf.xlu0
        %v915 = vpop.trf.xlu0
        %v916 = vpop.trf.xlu0
        %v917 = vpop.trf.xlu0
        %v918 = vpop.trf.xlu0
        %v919 = vpop.trf.xlu0
        %v920 = vpop.trf.xlu0
        %v921 = vpop.trf.xlu0
        %v922 = vpop.trf.xlu0
        %v923 = vpop.trf.xlu0
        %v924 = vpop.trf.xlu0
        %v926 = vsel %vm714, %v909, 0
        %928 = vmatprep.subr.mxu0 0.0
        %929 = vmatpush1.msra.mxu0 0.0
        %930 = vmatprep.subr.mxu0 0.0
        %931 = vmatpush1.msra.mxu0 0.0
        %932 = vmatprep.subr.mxu0 0.0
        %933 = vmatpush1.msra.mxu0 0.0
        %934 = vmatprep.subr.mxu0 0.0
        %935 = vmatpush1.msra.mxu0 0.0
        %936 = vmatprep.subr.mxu0 0.0
        %937 = vmatpush1.msra.mxu0 0.0
        %938 = vmatprep.subr.mxu0 0.0
        %939 = vmatpush1.msra.mxu0 0.0
        %940 = vmatprep.subr.mxu0 0.0
        %941 = vmatpush1.msra.mxu0 0.0
        %942 = vmatprep.subr.mxu0 0.0
        %943 = vmatpush1.msra.mxu0 0.0
        %944 = vmatprep.subr.mxu0 0.0
        %945 = vmatpush1.msra.mxu0 0.0
        %946 = vmatprep.subr.mxu0 0.0
        %947 = vmatpush1.msra.mxu0 0.0
        %948 = vmatprep.subr.mxu0 0.0
        %949 = vmatpush1.msra.mxu0 0.0
        %950 = vmatprep.subr.mxu0 0.0
        %951 = vmatpush1.msra.mxu0 0.0
        %952 = vmatprep.subr.mxu0 0.0
        %953 = vmatpush1.msra.mxu0 0.0
        %954 = vmatprep.subr.mxu0 0.0
        %955 = vmatpush1.msra.mxu0 0.0
        %956 = vmatprep.subr.mxu0 0.0
        %957 = vmatpush1.msra.mxu0 0.0
        %958 = vmatprep.subr.mxu0 0.0
        %959 = vmatpush1.msra.mxu0 %v549
        %960 = vmatprep.subr.mxu0 0.0
        %961 = vmatpush2.msra.mxu0 0.0
        %962 = vmatprep.subr.mxu0 0.0
        %963 = vmatpush2.msra.mxu0 0.0
        %964 = vmatprep.subr.mxu0 0.0
        %965 = vmatpush2.msra.mxu0 0.0
        %966 = vmatprep.subr.mxu0 0.0
        %967 = vmatpush2.msra.mxu0 0.0
        %968 = vmatprep.subr.mxu0 0.0
        %969 = vmatpush2.msra.mxu0 0.0
        %970 = vmatprep.subr.mxu0 0.0
        %971 = vmatpush2.msra.mxu0 0.0
        %972 = vmatprep.subr.mxu0 0.0
        %973 = vmatpush2.msra.mxu0 0.0
        %974 = vmatprep.subr.mxu0 0.0
        %975 = vmatpush2.msra.mxu0 0.0
        %976 = vmatprep.subr.mxu0 0.0
        %977 = vmatpush2.msra.mxu0 0.0
        %978 = vmatprep.subr.mxu0 0.0
        %979 = vmatpush2.msra.mxu0 0.0
        %980 = vmatprep.subr.mxu0 0.0
        %981 = vmatpush2.msra.mxu0 0.0
        %982 = vmatprep.subr.mxu0 0.0
        %983 = vmatpush2.msra.mxu0 0.0
        %984 = vmatprep.subr.mxu0 0.0
        %985 = vmatpush2.msra.mxu0 0.0
        %986 = vmatprep.subr.mxu0 0.0
        %987 = vmatpush2.msra.mxu0 0.0
        %988 = vmatprep.subr.mxu0 0.0
        %989 = vmatpush2.msra.mxu0 0.0
        %990 = vmatprep.subr.mxu0 0.0
        %991 = vmatpush2.msra.mxu0 0.0
        %992 = vmatprep.mubr.f32.mxu0 0.0
        %993 = vmatmul.mubr.f32.gmra.mxu0 %v926
        %v994 = vpop.f32.mrf.mxu0
        %v995 = vadd.f32 0.0, %v994
        %v996 = vpop.f32.mrf.mxu0
        %997 = vdwg.mxu0
        %998 = vxpose.xlu0.b32.start [1/16] %v431, 128
        %999 = vxpose.xlu0.b32.cont [2/16] 0.0, 128
        %1000 = vxpose.xlu0.b32.cont [3/16] 0.0, 128
        %1001 = vxpose.xlu0.b32.cont [4/16] 0.0, 128
        %1002 = vxpose.xlu0.b32.cont [5/16] 0.0, 128
        %1003 = vxpose.xlu0.b32.cont [6/16] 0.0, 128
        %1004 = vxpose.xlu0.b32.cont [7/16] 0.0, 128
        %1005 = vxpose.xlu0.b32.cont [8/16] 0.0, 128
        %1006 = vxpose.xlu0.b32.cont [9/16] 0.0, 128
        %1007 = vxpose.xlu0.b32.cont [10/16] 0.0, 128
        %1008 = vxpose.xlu0.b32.cont [11/16] 0.0, 128
        %1009 = vxpose.xlu0.b32.cont [12/16] 0.0, 128
        %1010 = vxpose.xlu0.b32.cont [13/16] 0.0, 128
        %1011 = vxpose.xlu0.b32.cont [14/16] 0.0, 128
        %1012 = vxpose.xlu0.b32.cont [15/16] 0.0, 128
        %1013 = vxpose.xlu0.b32.end [16/16] 0.0, 128
        %v1014 = vpop.trf.xlu0
        %v1015 = vpop.trf.xlu0
        %v1016 = vpop.trf.xlu0
        %v1017 = vpop.trf.xlu0
        %v1018 = vpop.trf.xlu0
        %v1019 = vpop.trf.xlu0
        %v1020 = vpop.trf.xlu0
        %v1021 = vpop.trf.xlu0
        %v1022 = vpop.trf.xlu0
        %v1023 = vpop.trf.xlu0
        %v1024 = vpop.trf.xlu0
        %v1025 = vpop.trf.xlu0
        %v1026 = vpop.trf.xlu0
        %v1027 = vpop.trf.xlu0
        %v1028 = vpop.trf.xlu0
        %v1029 = vpop.trf.xlu0
        %v1031 = vsel %vm714, %v1014, 0
        %1033 = vmatprep.subr.mxu0 0.0
        %1034 = vmatpush1.msra.mxu0 0.0
        %1035 = vmatprep.subr.mxu0 0.0
        %1036 = vmatpush1.msra.mxu0 0.0
        %1037 = vmatprep.subr.mxu0 0.0
        %1038 = vmatpush1.msra.mxu0 0.0
        %1039 = vmatprep.subr.mxu0 0.0
        %1040 = vmatpush1.msra.mxu0 0.0
        %1041 = vmatprep.subr.mxu0 0.0
        %1042 = vmatpush1.msra.mxu0 0.0
        %1043 = vmatprep.subr.mxu0 0.0
        %1044 = vmatpush1.msra.mxu0 0.0
        %1045 = vmatprep.subr.mxu0 0.0
        %1046 = vmatpush1.msra.mxu0 0.0
        %1047 = vmatprep.subr.mxu0 0.0
        %1048 = vmatpush1.msra.mxu0 0.0
        %1049 = vmatprep.subr.mxu0 0.0
        %1050 = vmatpush1.msra.mxu0 0.0
        %1051 = vmatprep.subr.mxu0 0.0
        %1052 = vmatpush1.msra.mxu0 0.0
        %1053 = vmatprep.subr.mxu0 0.0
        %1054 = vmatpush1.msra.mxu0 0.0
        %1055 = vmatprep.subr.mxu0 0.0
        %1056 = vmatpush1.msra.mxu0 0.0
        %1057 = vmatprep.subr.mxu0 0.0
        %1058 = vmatpush1.msra.mxu0 0.0
        %1059 = vmatprep.subr.mxu0 0.0
        %1060 = vmatpush1.msra.mxu0 0.0
        %1061 = vmatprep.subr.mxu0 0.0
        %1062 = vmatpush1.msra.mxu0 0.0
        %1063 = vmatprep.subr.mxu0 0.0
        %1064 = vmatpush1.msra.mxu0 %v550
        %1065 = vmatprep.subr.mxu0 0.0
        %1066 = vmatpush2.msra.mxu0 0.0
        %1067 = vmatprep.subr.mxu0 0.0
        %1068 = vmatpush2.msra.mxu0 0.0
        %1069 = vmatprep.subr.mxu0 0.0
        %1070 = vmatpush2.msra.mxu0 0.0
        %1071 = vmatprep.subr.mxu0 0.0
        %1072 = vmatpush2.msra.mxu0 0.0
        %1073 = vmatprep.subr.mxu0 0.0
        %1074 = vmatpush2.msra.mxu0 0.0
        %1075 = vmatprep.subr.mxu0 0.0
        %1076 = vmatpush2.msra.mxu0 0.0
        %1077 = vmatprep.subr.mxu0 0.0
        %1078 = vmatpush2.msra.mxu0 0.0
        %1079 = vmatprep.subr.mxu0 0.0
        %1080 = vmatpush2.msra.mxu0 0.0
        %1081 = vmatprep.subr.mxu0 0.0
        %1082 = vmatpush2.msra.mxu0 0.0
        %1083 = vmatprep.subr.mxu0 0.0
        %1084 = vmatpush2.msra.mxu0 0.0
        %1085 = vmatprep.subr.mxu0 0.0
        %1086 = vmatpush2.msra.mxu0 0.0
        %1087 = vmatprep.subr.mxu0 0.0
        %1088 = vmatpush2.msra.mxu0 0.0
        %1089 = vmatprep.subr.mxu0 0.0
        %1090 = vmatpush2.msra.mxu0 0.0
        %1091 = vmatprep.subr.mxu0 0.0
        %1092 = vmatpush2.msra.mxu0 0.0
        %1093 = vmatprep.subr.mxu0 0.0
        %1094 = vmatpush2.msra.mxu0 0.0
        %1095 = vmatprep.subr.mxu0 0.0
        %1096 = vmatpush2.msra.mxu0 0.0
        %1097 = vmatprep.mubr.f32.mxu0 0.0
        %1098 = vmatmul.mubr.f32.gmra.mxu0 %v1031
        %v1099 = vpop.f32.mrf.mxu0
        %v1100 = vadd.f32 0.0, %v1099
        %v1101 = vpop.f32.mrf.mxu0
        %1102 = vdwg.mxu0
        %v1103 = vsel %vm714, %v785, -inf
        %1104 = vmax.xlane.f32.xlu0 %v1103
        %v1105 = vpop.xlane.xlu0 %1104
        %v1106 = vsel %vm714, %v890, -inf
        %1107 = vmax.xlane.f32.xlu0 %v1106
        %v1108 = vpop.xlane.xlu0 %1107
        %v1109 = vsel %vm714, %v995, -inf
        %1110 = vmax.xlane.f32.xlu0 %v1109
        %v1111 = vpop.xlane.xlu0 %1110
        %v1112 = vsel %vm714, %v1100, -inf
        %1113 = vmax.xlane.f32.xlu0 %v1112
        %v1114 = vpop.xlane.xlu0 %1113
        %v1115 = vsub.f32 %v785, %v1105
        %v1116 = vsub.f32 %v890, %v1108
        %v1117 = vsub.f32 %v995, %v1111
        %v1118 = vsub.f32 %v1100, %v1114
        %v1119 = vmul.f32 %v1115, 1.442695
        %v1120 = vpow.pop %v1119
        %v1121 = vmul.f32 %v1116, 1.442695
        %v1122 = vpow.pop %v1121
        %v1123 = vmul.f32 %v1117, 1.442695
        %v1124 = vpow.pop %v1123
        %v1125 = vmul.f32 %v1118, 1.442695
        %v1126 = vpow.pop %v1125
        %v1127 = vsel %vm714, %v1120, 0.0
        %1128 = vadd.xlane.f32.xlu0 %v1127
        %v1129 = vpop.xlane.xlu0 %1128
        %v1130 = vsel %vm714, %v1122, 0.0
        %1131 = vadd.xlane.f32.xlu0 %v1130
        %v1132 = vpop.xlane.xlu0 %1131
        %v1133 = vsel %vm714, %v1124, 0.0
        %1134 = vadd.xlane.f32.xlu0 %v1133
        %v1135 = vpop.xlane.xlu0 %1134
        %v1136 = vsel %vm714, %v1126, 0.0
        %1137 = vadd.xlane.f32.xlu0 %v1136
        %v1138 = vpop.xlane.xlu0 %1137
        %v1139 = vrcp.pop %v1129
        %v1140 = vrcp.pop %v1132
        %v1141 = vrcp.pop %v1135
        %v1142 = vrcp.pop %v1138
        %v1143 = vmul.f32 %v1120, %v1139
        %v1144 = vmul.f32 %v1122, %v1140
        %v1145 = vmul.f32 %v1124, %v1141
        %v1146 = vmul.f32 %v1126, %v1142
        %v1148 = vsel %vm714, %v666, 0
        %v1151 = vsel %vm714, %v1143, 0
        %1153 = vmatprep.subr.mxu0 0.0
        %1154 = vmatpush1.xpose.msra.mxu0 0.0
        %1155 = vmatprep.subr.mxu0 0.0
        %1156 = vmatpush1.xpose.msra.mxu0 0.0
        %1157 = vmatprep.subr.mxu0 0.0
        %1158 = vmatpush1.xpose.msra.mxu0 0.0
        %1159 = vmatprep.subr.mxu0 0.0
        %1160 = vmatpush1.xpose.msra.mxu0 0.0
        %1161 = vmatprep.subr.mxu0 0.0
        %1162 = vmatpush1.xpose.msra.mxu0 0.0
        %1163 = vmatprep.subr.mxu0 0.0
        %1164 = vmatpush1.xpose.msra.mxu0 0.0
        %1165 = vmatprep.subr.mxu0 0.0
        %1166 = vmatpush1.xpose.msra.mxu0 0.0
        %1167 = vmatprep.subr.mxu0 0.0
        %1168 = vmatpush1.xpose.msra.mxu0 0.0
        %1169 = vmatprep.subr.mxu0 0.0
        %1170 = vmatpush1.xpose.msra.mxu0 0.0
        %1171 = vmatprep.subr.mxu0 0.0
        %1172 = vmatpush1.xpose.msra.mxu0 0.0
        %1173 = vmatprep.subr.mxu0 0.0
        %1174 = vmatpush1.xpose.msra.mxu0 0.0
        %1175 = vmatprep.subr.mxu0 0.0
        %1176 = vmatpush1.xpose.msra.mxu0 0.0
        %1177 = vmatprep.subr.mxu0 0.0
        %1178 = vmatpush1.xpose.msra.mxu0 0.0
        %1179 = vmatprep.subr.mxu0 0.0
        %1180 = vmatpush1.xpose.msra.mxu0 0.0
        %1181 = vmatprep.subr.mxu0 0.0
        %1182 = vmatpush1.xpose.msra.mxu0 0.0
        %1183 = vmatprep.subr.mxu0 0.0
        %1184 = vmatpush1.xpose.msra.mxu0 %v1151
        %1185 = vmatprep.subr.mxu0 0.0
        %1186 = vmatpush2.xpose.msra.mxu0 0.0
        %1187 = vmatprep.subr.mxu0 0.0
        %1188 = vmatpush2.xpose.msra.mxu0 0.0
        %1189 = vmatprep.subr.mxu0 0.0
        %1190 = vmatpush2.xpose.msra.mxu0 0.0
        %1191 = vmatprep.subr.mxu0 0.0
        %1192 = vmatpush2.xpose.msra.mxu0 0.0
        %1193 = vmatprep.subr.mxu0 0.0
        %1194 = vmatpush2.xpose.msra.mxu0 0.0
        %1195 = vmatprep.subr.mxu0 0.0
        %1196 = vmatpush2.xpose.msra.mxu0 0.0
        %1197 = vmatprep.subr.mxu0 0.0
        %1198 = vmatpush2.xpose.msra.mxu0 0.0
        %1199 = vmatprep.subr.mxu0 0.0
        %1200 = vmatpush2.xpose.msra.mxu0 0.0
        %1201 = vmatprep.subr.mxu0 0.0
        %1202 = vmatpush2.xpose.msra.mxu0 0.0
        %1203 = vmatprep.subr.mxu0 0.0
        %1204 = vmatpush2.xpose.msra.mxu0 0.0
        %1205 = vmatprep.subr.mxu0 0.0
        %1206 = vmatpush2.xpose.msra.mxu0 0.0
        %1207 = vmatprep.subr.mxu0 0.0
        %1208 = vmatpush2.xpose.msra.mxu0 0.0
        %1209 = vmatprep.subr.mxu0 0.0
        %1210 = vmatpush2.xpose.msra.mxu0 0.0
        %1211 = vmatprep.subr.mxu0 0.0
        %1212 = vmatpush2.xpose.msra.mxu0 0.0
        %1213 = vmatprep.subr.mxu0 0.0
        %1214 = vmatpush2.xpose.msra.mxu0 0.0
        %1215 = vmatprep.subr.mxu0 0.0
        %1216 = vmatpush2.xpose.msra.mxu0 0.0
        %1217 = vmatprep.mubr.f32.mxu0 0.0
        %1218 = vmatmul.mubr.f32.gmra.mxu0 %v1148
        %v1219 = vpop.f32.mrf.mxu0
        %v1220 = vadd.f32 0.0, %v1219
        %v1221 = vpop.f32.mrf.mxu0
        %1222 = vdwg.mxu0
        %v1224 = vsel %vm714, %v667, 0
        %v1227 = vsel %vm714, %v1144, 0
        %1229 = vmatprep.subr.mxu0 0.0
        %1230 = vmatpush1.xpose.msra.mxu0 0.0
        %1231 = vmatprep.subr.mxu0 0.0
        %1232 = vmatpush1.xpose.msra.mxu0 0.0
        %1233 = vmatprep.subr.mxu0 0.0
        %1234 = vmatpush1.xpose.msra.mxu0 0.0
        %1235 = vmatprep.subr.mxu0 0.0
        %1236 = vmatpush1.xpose.msra.mxu0 0.0
        %1237 = vmatprep.subr.mxu0 0.0
        %1238 = vmatpush1.xpose.msra.mxu0 0.0
        %1239 = vmatprep.subr.mxu0 0.0
        %1240 = vmatpush1.xpose.msra.mxu0 0.0
        %1241 = vmatprep.subr.mxu0 0.0
        %1242 = vmatpush1.xpose.msra.mxu0 0.0
        %1243 = vmatprep.subr.mxu0 0.0
        %1244 = vmatpush1.xpose.msra.mxu0 0.0
        %1245 = vmatprep.subr.mxu0 0.0
        %1246 = vmatpush1.xpose.msra.mxu0 0.0
        %1247 = vmatprep.subr.mxu0 0.0
        %1248 = vmatpush1.xpose.msra.mxu0 0.0
        %1249 = vmatprep.subr.mxu0 0.0
        %1250 = vmatpush1.xpose.msra.mxu0 0.0
        %1251 = vmatprep.subr.mxu0 0.0
        %1252 = vmatpush1.xpose.msra.mxu0 0.0
        %1253 = vmatprep.subr.mxu0 0.0
        %1254 = vmatpush1.xpose.msra.mxu0 0.0
        %1255 = vmatprep.subr.mxu0 0.0
        %1256 = vmatpush1.xpose.msra.mxu0 0.0
        %1257 = vmatprep.subr.mxu0 0.0
        %1258 = vmatpush1.xpose.msra.mxu0 0.0
        %1259 = vmatprep.subr.mxu0 0.0
        %1260 = vmatpush1.xpose.msra.mxu0 %v1227
        %1261 = vmatprep.subr.mxu0 0.0
        %1262 = vmatpush2.xpose.msra.mxu0 0.0
        %1263 = vmatprep.subr.mxu0 0.0
        %1264 = vmatpush2.xpose.msra.mxu0 0.0
        %1265 = vmatprep.subr.mxu0 0.0
        %1266 = vmatpush2.xpose.msra.mxu0 0.0
        %1267 = vmatprep.subr.mxu0 0.0
        %1268 = vmatpush2.xpose.msra.mxu0 0.0
        %1269 = vmatprep.subr.mxu0 0.0
        %1270 = vmatpush2.xpose.msra.mxu0 0.0
        %1271 = vmatprep.subr.mxu0 0.0
        %1272 = vmatpush2.xpose.msra.mxu0 0.0
        %1273 = vmatprep.subr.mxu0 0.0
        %1274 = vmatpush2.xpose.msra.mxu0 0.0
        %1275 = vmatprep.subr.mxu0 0.0
        %1276 = vmatpush2.xpose.msra.mxu0 0.0
        %1277 = vmatprep.subr.mxu0 0.0
        %1278 = vmatpush2.xpose.msra.mxu0 0.0
        %1279 = vmatprep.subr.mxu0 0.0
        %1280 = vmatpush2.xpose.msra.mxu0 0.0
        %1281 = vmatprep.subr.mxu0 0.0
        %1282 = vmatpush2.xpose.msra.mxu0 0.0
        %1283 = vmatprep.subr.mxu0 0.0
        %1284 = vmatpush2.xpose.msra.mxu0 0.0
        %1285 = vmatprep.subr.mxu0 0.0
        %1286 = vmatpush2.xpose.msra.mxu0 0.0
        %1287 = vmatprep.subr.mxu0 0.0
        %1288 = vmatpush2.xpose.msra.mxu0 0.0
        %1289 = vmatprep.subr.mxu0 0.0
        %1290 = vmatpush2.xpose.msra.mxu0 0.0
        %1291 = vmatprep.subr.mxu0 0.0
        %1292 = vmatpush2.xpose.msra.mxu0 0.0
        %1293 = vmatprep.mubr.f32.mxu0 0.0
        %1294 = vmatmul.mubr.f32.gmra.mxu0 %v1224
        %v1295 = vpop.f32.mrf.mxu0
        %v1296 = vadd.f32 0.0, %v1295
        %v1297 = vpop.f32.mrf.mxu0
        %1298 = vdwg.mxu0
        %v1300 = vsel %vm714, %v668, 0
        %v1303 = vsel %vm714, %v1145, 0
        %1305 = vmatprep.subr.mxu0 0.0
        %1306 = vmatpush1.xpose.msra.mxu0 0.0
        %1307 = vmatprep.subr.mxu0 0.0
        %1308 = vmatpush1.xpose.msra.mxu0 0.0
        %1309 = vmatprep.subr.mxu0 0.0
        %1310 = vmatpush1.xpose.msra.mxu0 0.0
        %1311 = vmatprep.subr.mxu0 0.0
        %1312 = vmatpush1.xpose.msra.mxu0 0.0
        %1313 = vmatprep.subr.mxu0 0.0
        %1314 = vmatpush1.xpose.msra.mxu0 0.0
        %1315 = vmatprep.subr.mxu0 0.0
        %1316 = vmatpush1.xpose.msra.mxu0 0.0
        %1317 = vmatprep.subr.mxu0 0.0
        %1318 = vmatpush1.xpose.msra.mxu0 0.0
        %1319 = vmatprep.subr.mxu0 0.0
        %1320 = vmatpush1.xpose.msra.mxu0 0.0
        %1321 = vmatprep.subr.mxu0 0.0
        %1322 = vmatpush1.xpose.msra.mxu0 0.0
        %1323 = vmatprep.subr.mxu0 0.0
        %1324 = vmatpush1.xpose.msra.mxu0 0.0
        %1325 = vmatprep.subr.mxu0 0.0
        %1326 = vmatpush1.xpose.msra.mxu0 0.0
        %1327 = vmatprep.subr.mxu0 0.0
        %1328 = vmatpush1.xpose.msra.mxu0 0.0
        %1329 = vmatprep.subr.mxu0 0.0
        %1330 = vmatpush1.xpose.msra.mxu0 0.0
        %1331 = vmatprep.subr.mxu0 0.0
        %1332 = vmatpush1.xpose.msra.mxu0 0.0
        %1333 = vmatprep.subr.mxu0 0.0
        %1334 = vmatpush1.xpose.msra.mxu0 0.0
        %1335 = vmatprep.subr.mxu0 0.0
        %1336 = vmatpush1.xpose.msra.mxu0 %v1303
        %1337 = vmatprep.subr.mxu0 0.0
        %1338 = vmatpush2.xpose.msra.mxu0 0.0
        %1339 = vmatprep.subr.mxu0 0.0
        %1340 = vmatpush2.xpose.msra.mxu0 0.0
        %1341 = vmatprep.subr.mxu0 0.0
        %1342 = vmatpush2.xpose.msra.mxu0 0.0
        %1343 = vmatprep.subr.mxu0 0.0
        %1344 = vmatpush2.xpose.msra.mxu0 0.0
        %1345 = vmatprep.subr.mxu0 0.0
        %1346 = vmatpush2.xpose.msra.mxu0 0.0
        %1347 = vmatprep.subr.mxu0 0.0
        %1348 = vmatpush2.xpose.msra.mxu0 0.0
        %1349 = vmatprep.subr.mxu0 0.0
        %1350 = vmatpush2.xpose.msra.mxu0 0.0
        %1351 = vmatprep.subr.mxu0 0.0
        %1352 = vmatpush2.xpose.msra.mxu0 0.0
        %1353 = vmatprep.subr.mxu0 0.0
        %1354 = vmatpush2.xpose.msra.mxu0 0.0
        %1355 = vmatprep.subr.mxu0 0.0
        %1356 = vmatpush2.xpose.msra.mxu0 0.0
        %1357 = vmatprep.subr.mxu0 0.0
        %1358 = vmatpush2.xpose.msra.mxu0 0.0
        %1359 = vmatprep.subr.mxu0 0.0
        %1360 = vmatpush2.xpose.msra.mxu0 0.0
        %1361 = vmatprep.subr.mxu0 0.0
        %1362 = vmatpush2.xpose.msra.mxu0 0.0
        %1363 = vmatprep.subr.mxu0 0.0
        %1364 = vmatpush2.xpose.msra.mxu0 0.0
        %1365 = vmatprep.subr.mxu0 0.0
        %1366 = vmatpush2.xpose.msra.mxu0 0.0
        %1367 = vmatprep.subr.mxu0 0.0
        %1368 = vmatpush2.xpose.msra.mxu0 0.0
        %1369 = vmatprep.mubr.f32.mxu0 0.0
        %1370 = vmatmul.mubr.f32.gmra.mxu0 %v1300
        %v1371 = vpop.f32.mrf.mxu0
        %v1372 = vadd.f32 0.0, %v1371
        %v1373 = vpop.f32.mrf.mxu0
        %1374 = vdwg.mxu0
        %v1376 = vsel %vm714, %v669, 0
        %v1379 = vsel %vm714, %v1146, 0
        %1381 = vmatprep.subr.mxu0 0.0
        %1382 = vmatpush1.xpose.msra.mxu0 0.0
        %1383 = vmatprep.subr.mxu0 0.0
        %1384 = vmatpush1.xpose.msra.mxu0 0.0
        %1385 = vmatprep.subr.mxu0 0.0
        %1386 = vmatpush1.xpose.msra.mxu0 0.0
        %1387 = vmatprep.subr.mxu0 0.0
        %1388 = vmatpush1.xpose.msra.mxu0 0.0
        %1389 = vmatprep.subr.mxu0 0.0
        %1390 = vmatpush1.xpose.msra.mxu0 0.0
        %1391 = vmatprep.subr.mxu0 0.0
        %1392 = vmatpush1.xpose.msra.mxu0 0.0
        %1393 = vmatprep.subr.mxu0 0.0
        %1394 = vmatpush1.xpose.msra.mxu0 0.0
        %1395 = vmatprep.subr.mxu0 0.0
        %1396 = vmatpush1.xpose.msra.mxu0 0.0
        %1397 = vmatprep.subr.mxu0 0.0
        %1398 = vmatpush1.xpose.msra.mxu0 0.0
        %1399 = vmatprep.subr.mxu0 0.0
        %1400 = vmatpush1.xpose.msra.mxu0 0.0
        %1401 = vmatprep.subr.mxu0 0.0
        %1402 = vmatpush1.xpose.msra.mxu0 0.0
        %1403 = vmatprep.subr.mxu0 0.0
        %1404 = vmatpush1.xpose.msra.mxu0 0.0
        %1405 = vmatprep.subr.mxu0 0.0
        %1406 = vmatpush1.xpose.msra.mxu0 0.0
        %1407 = vmatprep.subr.mxu0 0.0
        %1408 = vmatpush1.xpose.msra.mxu0 0.0
        %1409 = vmatprep.subr.mxu0 0.0
        %1410 = vmatpush1.xpose.msra.mxu0 0.0
        %1411 = vmatprep.subr.mxu0 0.0
        %1412 = vmatpush1.xpose.msra.mxu0 %v1379
        %1413 = vmatprep.subr.mxu0 0.0
        %1414 = vmatpush2.xpose.msra.mxu0 0.0
        %1415 = vmatprep.subr.mxu0 0.0
        %1416 = vmatpush2.xpose.msra.mxu0 0.0
        %1417 = vmatprep.subr.mxu0 0.0
        %1418 = vmatpush2.xpose.msra.mxu0 0.0
        %1419 = vmatprep.subr.mxu0 0.0
        %1420 = vmatpush2.xpose.msra.mxu0 0.0
        %1421 = vmatprep.subr.mxu0 0.0
        %1422 = vmatpush2.xpose.msra.mxu0 0.0
        %1423 = vmatprep.subr.mxu0 0.0
        %1424 = vmatpush2.xpose.msra.mxu0 0.0
        %1425 = vmatprep.subr.mxu0 0.0
        %1426 = vmatpush2.xpose.msra.mxu0 0.0
        %1427 = vmatprep.subr.mxu0 0.0
        %1428 = vmatpush2.xpose.msra.mxu0 0.0
        %1429 = vmatprep.subr.mxu0 0.0
        %1430 = vmatpush2.xpose.msra.mxu0 0.0
        %1431 = vmatprep.subr.mxu0 0.0
        %1432 = vmatpush2.xpose.msra.mxu0 0.0
        %1433 = vmatprep.subr.mxu0 0.0
        %1434 = vmatpush2.xpose.msra.mxu0 0.0
        %1435 = vmatprep.subr.mxu0 0.0
        %1436 = vmatpush2.xpose.msra.mxu0 0.0
        %1437 = vmatprep.subr.mxu0 0.0
        %1438 = vmatpush2.xpose.msra.mxu0 0.0
        %1439 = vmatprep.subr.mxu0 0.0
        %1440 = vmatpush2.xpose.msra.mxu0 0.0
        %1441 = vmatprep.subr.mxu0 0.0
        %1442 = vmatpush2.xpose.msra.mxu0 0.0
        %1443 = vmatprep.subr.mxu0 0.0
        %1444 = vmatpush2.xpose.msra.mxu0 0.0
        %1445 = vmatprep.mubr.f32.mxu0 0.0
        %1446 = vmatmul.mubr.f32.gmra.mxu0 %v1376
        %v1447 = vpop.f32.mrf.mxu0
        %v1448 = vadd.f32 0.0, %v1447
        %v1449 = vpop.f32.mrf.mxu0
        %1450 = vdwg.mxu0
        %1451 = vxpose.xlu0.b32.start [1/16] %v1220, 128
        %1452 = vxpose.xlu0.b32.cont [2/16] %v1296, 128
        %1453 = vxpose.xlu0.b32.cont [3/16] %v1372, 128
        %1454 = vxpose.xlu0.b32.cont [4/16] %v1448, 128
        %1455 = vxpose.xlu0.b32.cont [5/16] 0.0, 128
        %1456 = vxpose.xlu0.b32.cont [6/16] 0.0, 128
        %1457 = vxpose.xlu0.b32.cont [7/16] 0.0, 128
        %1458 = vxpose.xlu0.b32.cont [8/16] 0.0, 128
        %1459 = vxpose.xlu0.b32.cont [9/16] 0.0, 128
        %1460 = vxpose.xlu0.b32.cont [10/16] 0.0, 128
        %1461 = vxpose.xlu0.b32.cont [11/16] 0.0, 128
        %1462 = vxpose.xlu0.b32.cont [12/16] 0.0, 128
        %1463 = vxpose.xlu0.b32.cont [13/16] 0.0, 128
        %1464 = vxpose.xlu0.b32.cont [14/16] 0.0, 128
        %1465 = vxpose.xlu0.b32.cont [15/16] 0.0, 128
        %1466 = vxpose.xlu0.b32.end [16/16] 0.0, 128
        %v1467 = vpop.trf.xlu0
        %v1468 = vpop.trf.xlu0
        %v1469 = vpop.trf.xlu0
        %v1470 = vpop.trf.xlu0
        %v1471 = vpop.trf.xlu0
        %v1472 = vpop.trf.xlu0
        %v1473 = vpop.trf.xlu0
        %v1474 = vpop.trf.xlu0
        %v1475 = vpop.trf.xlu0
        %v1476 = vpop.trf.xlu0
        %v1477 = vpop.trf.xlu0
        %v1478 = vpop.trf.xlu0
        %v1479 = vpop.trf.xlu0
        %v1480 = vpop.trf.xlu0
        %v1481 = vpop.trf.xlu0
        %v1482 = vpop.trf.xlu0
        %s1483 = scalar_lea.vmem [#allocation8], 96
        %v1484 = vld [vmem:[%s1483] sm:$0xff]
        %v1485 = vld [vmem:[%s1483 + $0x8] sm:$0xff]
        %v1486 = vld [vmem:[%s1483 + $0x10] sm:$0xff]
        %v1487 = vld [vmem:[%s1483 + $0x18] sm:$0xff]
        %s1488 = scalar_lea.vmem %s4, 3
        %v1489 = vld [vmem:[%s1488] sm:$0x1]
        %v1491 = vlaneseq
        %v1492 = vshrl.u32 %v1491, 7
        %v1493 = vsub.s32 0, %v1492
        %v1494 = vrot.slane %v1489, %v1493
        %v1497 = vsel %vm338, %v1467, 0
        %1499 = vmatprep.subr.mxu0 0.0
        %1500 = vmatpush1.msra.mxu0 0.0
        %1501 = vmatprep.subr.mxu0 0.0
        %1502 = vmatpush1.msra.mxu0 0.0
        %1503 = vmatprep.subr.mxu0 0.0
        %1504 = vmatpush1.msra.mxu0 0.0
        %1505 = vmatprep.subr.mxu0 0.0
        %1506 = vmatpush1.msra.mxu0 0.0
        %1507 = vmatprep.subr.mxu0 0.0
        %1508 = vmatpush1.msra.mxu0 0.0
        %1509 = vmatprep.subr.mxu0 0.0
        %1510 = vmatpush1.msra.mxu0 0.0
        %1511 = vmatprep.subr.mxu0 0.0
        %1512 = vmatpush1.msra.mxu0 0.0
        %1513 = vmatprep.subr.mxu0 0.0
        %1514 = vmatpush1.msra.mxu0 0.0
        %1515 = vmatprep.subr.mxu0 0.0
        %1516 = vmatpush1.msra.mxu0 0.0
        %1517 = vmatprep.subr.mxu0 0.0
        %1518 = vmatpush1.msra.mxu0 0.0
        %1519 = vmatprep.subr.mxu0 0.0
        %1520 = vmatpush1.msra.mxu0 0.0
        %1521 = vmatprep.subr.mxu0 0.0
        %1522 = vmatpush1.msra.mxu0 0.0
        %1523 = vmatprep.subr.mxu0 0.0
        %1524 = vmatpush1.msra.mxu0 %v1487
        %1525 = vmatprep.subr.mxu0 0.0
        %1526 = vmatpush1.msra.mxu0 %v1486
        %1527 = vmatprep.subr.mxu0 0.0
        %1528 = vmatpush1.msra.mxu0 %v1485
        %1529 = vmatprep.subr.mxu0 0.0
        %1530 = vmatpush1.msra.mxu0 %v1484
        %1531 = vmatprep.subr.mxu0 0.0
        %1532 = vmatpush2.msra.mxu0 0.0
        %1533 = vmatprep.subr.mxu0 0.0
        %1534 = vmatpush2.msra.mxu0 0.0
        %1535 = vmatprep.subr.mxu0 0.0
        %1536 = vmatpush2.msra.mxu0 0.0
        %1537 = vmatprep.subr.mxu0 0.0
        %1538 = vmatpush2.msra.mxu0 0.0
        %1539 = vmatprep.subr.mxu0 0.0
        %1540 = vmatpush2.msra.mxu0 0.0
        %1541 = vmatprep.subr.mxu0 0.0
        %1542 = vmatpush2.msra.mxu0 0.0
        %1543 = vmatprep.subr.mxu0 0.0
        %1544 = vmatpush2.msra.mxu0 0.0
        %1545 = vmatprep.subr.mxu0 0.0
        %1546 = vmatpush2.msra.mxu0 0.0
        %1547 = vmatprep.subr.mxu0 0.0
        %1548 = vmatpush2.msra.mxu0 0.0
        %1549 = vmatprep.subr.mxu0 0.0
        %1550 = vmatpush2.msra.mxu0 0.0
        %1551 = vmatprep.subr.mxu0 0.0
        %1552 = vmatpush2.msra.mxu0 0.0
        %1553 = vmatprep.subr.mxu0 0.0
        %1554 = vmatpush2.msra.mxu0 0.0
        %1555 = vmatprep.subr.mxu0 0.0
        %1556 = vmatpush2.msra.mxu0 0.0
        %1557 = vmatprep.subr.mxu0 0.0
        %1558 = vmatpush2.msra.mxu0 0.0
        %1559 = vmatprep.subr.mxu0 0.0
        %1560 = vmatpush2.msra.mxu0 0.0
        %1561 = vmatprep.subr.mxu0 0.0
        %1562 = vmatpush2.msra.mxu0 0.0
        %1563 = vmatprep.mubr.f32.mxu0 0.0
        %1564 = vmatmul.mubr.f32.gmra.mxu0 %v1497
        %v1565 = vpop.f32.mrf.mxu0
        %v1566 = vadd.f32 %v1494, %v1565
        %v1567 = vpop.f32.mrf.mxu0
        %1568 = vdwg.mxu0
        %1569 = vst.msk [vmem:[%s325] sm:$0xff] %vm338, %v1566
        %s1570 = sand.u32 %s154, 1
        %s1571 = scalar_lea.sflag [#allocation4], %s1570
        %s1572 = sand.u32 %s154, 1
        %s1573 = smul.addr %s1572, 8
        %s1574 = scalar_lea.vmem [#allocation10], %s1573
        // Predicated region
        $region57: #{tpu_custom_call.1} parent=39 // pred_check
          %p1575 = pneg %p164
        $region58: #{tpu_custom_call.1} parent=39 // pred_check_branch
          %1577 = sbr.rel (%p1575) target = $region60
        $region59: #{tpu_custom_call.1} parent=39 // pred_region
          %s1579 = ssub.s32 128, 128
          %1580 = vsyncadd %s1571, %s1579
          %s1581 = smul.addr %s26, 128
          %s1582 = scalar_lea.hbm %s5, %s1581
          %s1584 = sshll.u32 %s1574, 4
          %s1585 = int_to_ptr.vmem [resolvable:$true] %s1584
          %1587 = dma.vmem_to_hbm [thread:$0]  %s1585, 128, %s1582, %s1571
        $region60: #{tpu_custom_call.1} parent=39 // pred_fallthru
          _
      $region40: #{tpu_custom_call.1} parent=5 // pred_fallthru
        _
      %p1588 = scmp.le.s32.totalorder 2, %s21
      // Predicated region
      $region61: #{tpu_custom_call.1} parent=5 // pred_check
        %p1589 = pneg %p1588
      $region62: #{tpu_custom_call.1} parent=5 // pred_check_branch
        %1591 = sbr.rel (%p1589) target = $region64
      $region63: #{tpu_custom_call.1} parent=5 // pred_region
        %s1592 = ssub.s32 %s21, 2
        // Predicated region
        $region65: #{tpu_custom_call.1} parent=63 // pred_check
          %p1593 = pneg %p170
        $region66: #{tpu_custom_call.1} parent=63 // pred_check_branch
          %1595 = sbr.rel (%p1593) target = $region68
        $region67: #{tpu_custom_call.1} parent=63 // pred_region
          %s1596 = sand.u32 %s155, 1
          %s1597 = scalar_lea.sflag [#allocation4], %s1596
          %s1598 = sand.u32 %s155, 1
          %s1599 = smul.addr %s1598, 8
          %s1600 = scalar_lea.vmem [#allocation10], %s1599
          %1601 = dma.done %s1597, 128
        $region68: #{tpu_custom_call.1} parent=63 // pred_fallthru
          _
      $region64: #{tpu_custom_call.1} parent=5 // pred_fallthru
        _
    $region6: #{tpu_custom_call.1} parent=1 // loop_footer
      %s25 = sadd.s32 1, %s21
    $region7: #{tpu_custom_call.1} parent=1 // loop_footer_branch
      %20 = sbr.rel target = $region3
    $region8: #{tpu_custom_call.1} parent=1 // loop_exit
      _
    %1602 = vsyncpa [#allocation3], 1
    %s1603 = scalar_lea.sflag [#allocation3], 1
    %1604 = vsyncpa %s1603, 1
    %1605 = vsyncpa [#allocation6], 1
    %s1606 = scalar_lea.sflag [#allocation6], 1
    %1607 = vsyncpa %s1606, 1
    %1608 = vsyncpa [#allocation9], 1
    %1609 = vsyncpa [#allocation4], 1
    %s1610 = scalar_lea.sflag [#allocation4], 1
    %1611 = vsyncpa %s1610, 1

</llo_original>
